<compile_context>
chip_gen: v7x
topology: tpu7x:2x2x1
jax: 0.10.0
libtpu: 0.0.40
codegen_flags: <defaults>
</compile_context>

<pallas_src>
import functools

import jax
import jax.numpy as jnp
from jax.experimental import pallas as pl
from jax.experimental.pallas import tpu as pltpu


# ------------------------------ fused kernel ----------------------------------
def _fused_lstm_kernel(*refs, hidden_size, num_layers, seq_len, batch, apply_sigmoid):
    H, S, L, B = hidden_size, seq_len, num_layers, batch

    x_ref = refs[0]                         # (B*S, I)  batch-major flattened input
    fc_w_ref = refs[1 + 3 * L]              # (O, H)    PyTorch fc.weight layout
    fc_b_ref = refs[2 + 3 * L]              # (1, O)
    o_ref = refs[3 + 3 * L]                 # (B, O)
    gx_ref = refs[4 + 3 * L]                # VMEM scratch (B*S, 4H) f32

    # ---- hoisted constants (built once, reused across the static unroll) -----
    # PyTorch gate layout [i | f | g | o].  Single-EUP-push trick:
    #   sigmoid on i/f/o lanes, tanh on g lanes via tanh(x) = 2*sigmoid(2x) - 1.
    lane = jax.lax.broadcasted_iota(jnp.int32, (B, 4 * H), 1)
    g_mask = jnp.logical_and(lane >= 2 * H, lane < 3 * H)
    pre_scale = jnp.where(g_mask, 2.0, 1.0).astype(jnp.float32)   # 2 on g lanes
    post_scale = pre_scale
    post_shift = jnp.where(g_mask, -1.0, 0.0).astype(jnp.float32)

    # Per-layer recurrent weights, hoisted and downcast to bf16 for the MXU.
    w_rec = []      # layer 0: (H, 4H); layers >= 1: stacked [w_ih; w_hh] -> (2H, 4H)
    bias = []       # (1, 4H) combined b_ih + b_hh, kept f32
    for l in range(L):
        w_ih = refs[1 + 3 * l][...]
        w_hh = refs[2 + 3 * l][...]
        if l == 0:
            w_rec.append(w_hh.astype(jnp.bfloat16))
        else:
            w_rec.append(jnp.concatenate([w_ih, w_hh], axis=0).astype(jnp.bfloat16))
        bias.append(refs[3 + 3 * l][...])

    # ---- layer-0 input projection hoisted out of the recurrence --------------
    # One (B*S, I) @ (I, 4H) bf16 MXU matmul (+ bias added once), stored to VMEM
    # scratch; the per-step read is a cheap sublane-strided load (row = b*S + t).
    w_ih0 = refs[1][...]
    gx_ref[...] = (
        jnp.dot(x_ref[...].astype(jnp.bfloat16), w_ih0.astype(jnp.bfloat16),
                preferred_element_type=jnp.float32) + bias[0])

    def lstm_cell(pre_act, c_prev):
        """pre_act (B, 4H) f32 -> (h, c).  One sigmoid push + one tanh(c) push."""
        s = jax.nn.sigmoid(pre_act * pre_scale)
        act = s * post_scale + post_shift        # tanh on g lanes, sigmoid elsewhere
        i_g = act[:, 0 * H:1 * H]
        f_g = act[:, 1 * H:2 * H]
        g_g = act[:, 2 * H:3 * H]
        o_g = act[:, 3 * H:4 * H]
        c = f_g * c_prev + i_g * g_g
        h = o_g * jnp.tanh(c)
        return h, c

    # ---- wavefront-interleaved recurrence (static unroll, strictly serial deps) ----
    # Wave w runs layer l's step t = w - l.  Every step in a wave depends only on the
    # previous wave's state, so the per-wave matmuls / EUP pushes are independent and
    # the scheduler can overlap them (hides MXU fill / MRF drain latency).
    h = [jnp.zeros((B, H), jnp.float32) for _ in range(L)]
    c = [jnp.zeros((B, H), jnp.float32) for _ in range(L)]
    h_last = None
    for w in range(S + L - 1):
        h_snap = list(h)                     # state as of the end of the previous wave
        for l in range(L):
            t = w - l
            if t < 0 or t >= S:
                continue
            if l == 0:
                gx_t = gx_ref[pl.ds(t, B, stride=S), :]            # (B, 4H)
                gates = gx_t + jnp.dot(h_snap[0].astype(jnp.bfloat16), w_rec[0],
                                       preferred_element_type=jnp.float32)
            else:
                # Fused per-step matmul: [h_{l-1,t} | h_{l,t-1}] @ [w_ih_l; w_hh_l].
                inp = jnp.concatenate([h_snap[l - 1], h_snap[l]], axis=1)   # (B, 2H)
                gates = jnp.dot(inp.astype(jnp.bfloat16), w_rec[l],
                                preferred_element_type=jnp.float32) + bias[l]
            h[l], c[l] = lstm_cell(gates, c[l])
            if l == L - 1 and t == S - 1:
                h_last = h[l]                # out[:, -1, :] — only this is consumed

    # TODO(synk): inter-layer LSTM dropout and self.dropout omitted (eval/inference -> identity)

    fc_w = fc_w_ref[...]                     # (O, H)
    fc_b = fc_b_ref[...]                     # (1, O)
    if fc_w.shape[0] == 1:
        # output_size == 1: VPU multiply + lane reduction (avoid an N=1 MXU matmul).
        logits = jnp.sum(h_last * fc_w, axis=-1, keepdims=True) + fc_b
    else:
        logits = jax.lax.dot_general(h_last, fc_w, (((1,), (1,)), ((), ())),
                                     preferred_element_type=jnp.float32) + fc_b
    if apply_sigmoid:                        # matches the module: Sigmoid iff output_size == 1
        logits = jax.nn.sigmoid(logits)
    o_ref[...] = logits.astype(o_ref.dtype)


# ------------------------------- Model wrapper --------------------------------
def init_lstm_model_params(key, input_size, hidden_size, num_layers, output_size):
    """Deterministic init mirroring PyTorch's U(-1/sqrt(H), 1/sqrt(H))."""
    params = {}
    k = 1.0 / jnp.sqrt(jnp.float32(hidden_size))
    for layer in range(num_layers):
        in_sz = input_size if layer == 0 else hidden_size
        key, k1, k2, k3, k4 = jax.random.split(key, 5)
        w_ih = jax.random.uniform(k1, (4 * hidden_size, in_sz), jnp.float32, -k, k)
        w_hh = jax.random.uniform(k2, (4 * hidden_size, hidden_size), jnp.float32, -k, k)
        b_ih = jax.random.uniform(k3, (4 * hidden_size,), jnp.float32, -k, k)
        b_hh = jax.random.uniform(k4, (4 * hidden_size,), jnp.float32, -k, k)
        params[f"layer{layer}"] = (
            w_ih.T,                                    # (in_sz, 4H)
            w_hh.T,                                    # (H, 4H)
            (b_ih + b_hh).reshape(1, 4 * hidden_size)  # (1, 4H) combined bias
        )
    key, k5, k6 = jax.random.split(key, 3)
    fc_w = jax.random.uniform(k5, (output_size, hidden_size), jnp.float32, -k, k)
    fc_b = jax.random.uniform(k6, (output_size,), jnp.float32, -k, k)
    params["fc_w"] = fc_w                       # (O, H) -- PyTorch layout
    params["fc_b"] = fc_b.reshape(1, output_size)
    return params


def lstm_model_forward(x, params, hidden_size, num_layers, output_size):
    """x: (batch, seq, input_size) -- PyTorch batch-first convention."""
    B, S, I = x.shape
    # Lane-layout assumption of the gate-mask trick; kernel is still correct otherwise
    # but would silently pay lane padding.
    assert (4 * hidden_size) % 128 == 0, "hidden_size must be a multiple of 32"

    x_flat = x.astype(jnp.float32).reshape(B * S, I)   # free reshape, last dim unchanged
    args = [x_flat]
    for layer in range(num_layers):
        args.extend(params[f"layer{layer}"])
    args.append(params["fc_w"])
    args.append(params["fc_b"])

    kernel = functools.partial(
        _fused_lstm_kernel,
        hidden_size=hidden_size,
        num_layers=num_layers,
        seq_len=S,
        batch=B,
        apply_sigmoid=(output_size == 1),
    )
    vmem_spec = pl.BlockSpec(memory_space=pltpu.MemorySpace.VMEM)
    # NOTE: single un-gridded call runs on one TensorCore; add a batch grid with
    # dimension_semantics=("parallel",) only if B grows to hundreds (v7x megacore).
    return pl.pallas_call(
        kernel,
        out_shape=jax.ShapeDtypeStruct((B, output_size), jnp.float32),
        in_specs=[vmem_spec] * len(args),
        out_specs=vmem_spec,
        scratch_shapes=[pltpu.VMEM((B * S, 4 * hidden_size), jnp.float32)],
    )(*args)


# ----------------------------- pure-JAX reference ------------------------------
def _lstm_reference(x, params, hidden_size, num_layers, output_size):
    B, S, _ = x.shape
    H = hidden_size
    layer_in = x.astype(jnp.float32)
    for l in range(num_layers):
        w_ih, w_hh, b = params[f"layer{l}"]
        h = jnp.zeros((B, H), jnp.float32)
        c = jnp.zeros((B, H), jnp.float32)
        outs = []
        for t in range(S):
            g = layer_in[:, t, :] @ w_ih + h @ w_hh + b
            i = jax.nn.sigmoid(g[:, 0 * H:1 * H])
            f = jax.nn.sigmoid(g[:, 1 * H:2 * H])
            gg = jnp.tanh(g[:, 2 * H:3 * H])
            o = jax.nn.sigmoid(g[:, 3 * H:4 * H])
            c = f * c + i * gg
            h = o * jnp.tanh(c)
            outs.append(h)
        layer_in = jnp.stack(outs, axis=1)
    logits = layer_in[:, -1, :] @ params["fc_w"].T + params["fc_b"]
    return jax.nn.sigmoid(logits) if output_size == 1 else logits


if __name__ == "__main__":
    BATCH, SEQ, INPUT_SIZE = 8, 8, 16
    HIDDEN_SIZE, NUM_LAYERS, OUTPUT_SIZE = 32, 2, 1

    key = jax.random.PRNGKey(0)
    key, xk = jax.random.split(key)
    x = jax.random.normal(xk, (BATCH, SEQ, INPUT_SIZE), jnp.float32)

    params = init_lstm_model_params(key, INPUT_SIZE, HIDDEN_SIZE, NUM_LAYERS, OUTPUT_SIZE)

    out = lstm_model_forward(x, params, HIDDEN_SIZE, NUM_LAYERS, OUTPUT_SIZE)
    out = jax.block_until_ready(out)
    assert out.shape == (BATCH, OUTPUT_SIZE)
    assert bool(jnp.all(jnp.isfinite(out)))
    assert bool(jnp.all((out >= 0.0) & (out <= 1.0)))   # sigmoid range

    ref = _lstm_reference(x, params, HIDDEN_SIZE, NUM_LAYERS, OUTPUT_SIZE)
    ref = jax.block_until_ready(ref)
    # bf16 MXU operands vs. f32 reference -> loose tolerance.
    assert bool(jnp.max(jnp.abs(out - ref)) < 3e-2)

    print("KERNEL_OK")
</pallas_src>

<mosaic_0001>
module attributes {stable_mosaic.version = 11 : i64} {
  func.func @_fused_lstm_kernel(%arg0: memref<64x16xf32, #tpu.memory_space<vmem>>, %arg1: memref<16x128xf32, #tpu.memory_space<vmem>>, %arg2: memref<32x128xf32, #tpu.memory_space<vmem>>, %arg3: memref<1x128xf32, #tpu.memory_space<vmem>>, %arg4: memref<32x128xf32, #tpu.memory_space<vmem>>, %arg5: memref<32x128xf32, #tpu.memory_space<vmem>>, %arg6: memref<1x128xf32, #tpu.memory_space<vmem>>, %arg7: memref<1x32xf32, #tpu.memory_space<vmem>>, %arg8: memref<1x1xf32, #tpu.memory_space<vmem>>, %arg9: memref<8x1xf32, #tpu.memory_space<vmem>>, %arg10: memref<64x128xf32, #tpu.memory_space<vmem>>) attributes {dimension_semantics = [], scalar_prefetch = 0 : i64, scratch_operands = 1 : i64, tpu.core_type = #tpu.core_type<tc>} {
    %0 = tpu.iota {dimensions = array<i32: 1>} : vector<8x128xi32>
    %c64_i32 = arith.constant 64 : i32
    %1 = vector.broadcast %c64_i32 : i32 to vector<8x128xi32>
    %2 = arith.cmpi sge, %0, %1 : vector<8x128xi32>
    %c96_i32 = arith.constant 96 : i32
    %3 = vector.broadcast %c96_i32 : i32 to vector<8x128xi32>
    %4 = arith.cmpi slt, %0, %3 : vector<8x128xi32>
    %5 = arith.andi %2, %4 : vector<8x128xi1>
    %cst = arith.constant 2.000000e+00 : f32
    %cst_0 = arith.constant 1.000000e+00 : f32
    %6 = vector.broadcast %cst : f32 to vector<8x128xf32>
    %7 = vector.broadcast %cst_0 : f32 to vector<8x128xf32>
    %8 = arith.select %5, %6, %7 : vector<8x128xi1>, vector<8x128xf32>
    %cst_1 = arith.constant -1.000000e+00 : f32
    %cst_2 = arith.constant 0.000000e+00 : f32
    %9 = vector.broadcast %cst_1 : f32 to vector<8x128xf32>
    %10 = vector.broadcast %cst_2 : f32 to vector<8x128xf32>
    %11 = arith.select %5, %9, %10 : vector<8x128xi1>, vector<8x128xf32>
    %c0 = arith.constant 0 : index
    %c0_3 = arith.constant 0 : index
    %12 = vector.load %arg2[%c0, %c0_3] : memref<32x128xf32, #tpu.memory_space<vmem>>, vector<32x128xf32>
    %13 = arith.truncf %12 : vector<32x128xf32> to vector<32x128xbf16>
    %c0_4 = arith.constant 0 : index
    %c0_5 = arith.constant 0 : index
    %14 = vector.load %arg3[%c0_4, %c0_5] : memref<1x128xf32, #tpu.memory_space<vmem>>, vector<1x128xf32>
    %c0_6 = arith.constant 0 : index
    %c0_7 = arith.constant 0 : index
    %15 = vector.load %arg4[%c0_6, %c0_7] : memref<32x128xf32, #tpu.memory_space<vmem>>, vector<32x128xf32>
    %c0_8 = arith.constant 0 : index
    %c0_9 = arith.constant 0 : index
    %16 = vector.load %arg5[%c0_8, %c0_9] : memref<32x128xf32, #tpu.memory_space<vmem>>, vector<32x128xf32>
    %17 = tpu.concatenate %15, %16 in 0 : vector<32x128xf32>, vector<32x128xf32> -> vector<64x128xf32>
    %18 = arith.truncf %17 : vector<64x128xf32> to vector<64x128xbf16>
    %c0_10 = arith.constant 0 : index
    %c0_11 = arith.constant 0 : index
    %19 = vector.load %arg6[%c0_10, %c0_11] : memref<1x128xf32, #tpu.memory_space<vmem>>, vector<1x128xf32>
    %c0_12 = arith.constant 0 : index
    %c0_13 = arith.constant 0 : index
    %20 = vector.load %arg1[%c0_12, %c0_13] : memref<16x128xf32, #tpu.memory_space<vmem>>, vector<16x128xf32>
    %c0_14 = arith.constant 0 : index
    %c0_15 = arith.constant 0 : index
    %21 = vector.load %arg0[%c0_14, %c0_15] : memref<64x16xf32, #tpu.memory_space<vmem>>, vector<64x16xf32>
    %22 = arith.truncf %21 : vector<64x16xf32> to vector<64x16xbf16>
    %23 = arith.truncf %20 : vector<16x128xf32> to vector<16x128xbf16>
    %cst_16 = arith.constant dense<0.000000e+00> : vector<64x128xf32>
    %24 = tpu.matmul %22, %23, %cst_16 {dimension_numbers = #tpu.dot_dimension_numbers<[1], [0], [0], [1], [0, 0, 1, 1], [], []>} : vector<64x16xbf16>, vector<16x128xbf16>, vector<64x128xf32> -> vector<64x128xf32>
    %25 = vector.broadcast %14 : vector<1x128xf32> to vector<64x128xf32>
    %26 = arith.addf %24, %25 : vector<64x128xf32>
    %c0_17 = arith.constant 0 : index
    %c0_18 = arith.constant 0 : index
    %27 = vector.load %arg10[%c0_17, %c0_18] : memref<64x128xf32, #tpu.memory_space<vmem>>, vector<64x128xf32>
    tpu.vector_store %arg10[%c0_17, %c0_18], %26 {strides = array<i32>} : memref<64x128xf32, #tpu.memory_space<vmem>>, vector<64x128xf32>,
    %cst_19 = arith.constant 0.000000e+00 : f32
    %28 = vector.broadcast %cst_19 : f32 to vector<8x32xf32>
    %cst_20 = arith.constant 0.000000e+00 : f32
    %29 = vector.broadcast %cst_20 : f32 to vector<8x32xf32>
    %cst_21 = arith.constant 0.000000e+00 : f32
    %30 = vector.broadcast %cst_21 : f32 to vector<8x32xf32>
    %cst_22 = arith.constant 0.000000e+00 : f32
    %31 = vector.broadcast %cst_22 : f32 to vector<8x32xf32>
    %c0_23 = arith.constant 0 : index
    %c0_24 = arith.constant 0 : index
    %32 = tpu.strided_load %arg10[%c0_23, %c0_24] {strides = array<i32: 8, 1>} : memref<64x128xf32, #tpu.memory_space<vmem>>, vector<8x128xf32>
    %33 = arith.truncf %28 : vector<8x32xf32> to vector<8x32xbf16>
    %cst_25 = arith.constant dense<0.000000e+00> : vector<8x128xf32>
    %34 = tpu.matmul %33, %13, %cst_25 {dimension_numbers = #tpu.dot_dimension_numbers<[1], [0], [0], [1], [0, 0, 1, 1], [], []>} : vector<8x32xbf16>, vector<32x128xbf16>, vector<8x128xf32> -> vector<8x128xf32>
    %35 = arith.addf %32, %34 : vector<8x128xf32>
    %36 = arith.mulf %35, %8 : vector<8x128xf32>
    %37 = arith.negf %36 : vector<8x128xf32>
    %38 = math.exp %37 : vector<8x128xf32>
    %cst_26 = arith.constant 1.000000e+00 : f32
    %39 = vector.broadcast %cst_26 : f32 to vector<8x128xf32>
    %40 = arith.addf %39, %38 : vector<8x128xf32>
    %41 = arith.divf %39, %40 : vector<8x128xf32>
    %42 = arith.mulf %41, %8 : vector<8x128xf32>
    %43 = arith.addf %42, %11 : vector<8x128xf32>
    %44 = vector.extract_strided_slice %43 {offsets = [0, 0], sizes = [8, 32], strides = [1, 1]} : vector<8x128xf32> to vector<8x32xf32>
    %45 = vector.extract_strided_slice %43 {offsets = [0, 32], sizes = [8, 32], strides = [1, 1]} : vector<8x128xf32> to vector<8x32xf32>
    %46 = vector.extract_strided_slice %43 {offsets = [0, 64], sizes = [8, 32], strides = [1, 1]} : vector<8x128xf32> to vector<8x32xf32>
    %47 = vector.extract_strided_slice %43 {offsets = [0, 96], sizes = [8, 32], strides = [1, 1]} : vector<8x128xf32> to vector<8x32xf32>
    %48 = arith.mulf %45, %30 : vector<8x32xf32>
    %49 = arith.mulf %44, %46 : vector<8x32xf32>
    %50 = arith.addf %48, %49 : vector<8x32xf32>
    %51 = math.tanh %50 : vector<8x32xf32>
    %52 = arith.mulf %47, %51 : vector<8x32xf32>
    %c1 = arith.constant 1 : index
    %c0_27 = arith.constant 0 : index
    %53 = tpu.strided_load %arg10[%c1, %c0_27] {strides = array<i32: 8, 1>} : memref<64x128xf32, #tpu.memory_space<vmem>>, vector<8x128xf32>
    %54 = arith.truncf %52 : vector<8x32xf32> to vector<8x32xbf16>
    %cst_28 = arith.constant dense<0.000000e+00> : vector<8x128xf32>
    %55 = tpu.matmul %54, %13, %cst_28 {dimension_numbers = #tpu.dot_dimension_numbers<[1], [0], [0], [1], [0, 0, 1, 1], [], []>} : vector<8x32xbf16>, vector<32x128xbf16>, vector<8x128xf32> -> vector<8x128xf32>
    %56 = arith.addf %53, %55 : vector<8x128xf32>
    %57 = arith.mulf %56, %8 : vector<8x128xf32>
    %58 = arith.negf %57 : vector<8x128xf32>
    %59 = math.exp %58 : vector<8x128xf32>
    %cst_29 = arith.constant 1.000000e+00 : f32
    %60 = vector.broadcast %cst_29 : f32 to vector<8x128xf32>
    %61 = arith.addf %60, %59 : vector<8x128xf32>
    %62 = arith.divf %60, %61 : vector<8x128xf32>
    %63 = arith.mulf %62, %8 : vector<8x128xf32>
    %64 = arith.addf %63, %11 : vector<8x128xf32>
    %65 = vector.extract_strided_slice %64 {offsets = [0, 0], sizes = [8, 32], strides = [1, 1]} : vector<8x128xf32> to vector<8x32xf32>
    %66 = vector.extract_strided_slice %64 {offsets = [0, 32], sizes = [8, 32], strides = [1, 1]} : vector<8x128xf32> to vector<8x32xf32>
    %67 = vector.extract_strided_slice %64 {offsets = [0, 64], sizes = [8, 32], strides = [1, 1]} : vector<8x128xf32> to vector<8x32xf32>
    %68 = vector.extract_strided_slice %64 {offsets = [0, 96], sizes = [8, 32], strides = [1, 1]} : vector<8x128xf32> to vector<8x32xf32>
    %69 = arith.mulf %66, %50 : vector<8x32xf32>
    %70 = arith.mulf %65, %67 : vector<8x32xf32>
    %71 = arith.addf %69, %70 : vector<8x32xf32>
    %72 = math.tanh %71 : vector<8x32xf32>
    %73 = arith.mulf %68, %72 : vector<8x32xf32>
    %74 = tpu.concatenate %52, %29 in 1 : vector<8x32xf32>, vector<8x32xf32> -> vector<8x64xf32>
    %75 = arith.truncf %74 : vector<8x64xf32> to vector<8x64xbf16>
    %cst_30 = arith.constant dense<0.000000e+00> : vector<8x128xf32>
    %76 = tpu.matmul %75, %18, %cst_30 {dimension_numbers = #tpu.dot_dimension_numbers<[1], [0], [0], [1], [0, 0, 1, 1], [], []>} : vector<8x64xbf16>, vector<64x128xbf16>, vector<8x128xf32> -> vector<8x128xf32>
    %77 = vector.broadcast %19 : vector<1x128xf32> to vector<8x128xf32>
    %78 = arith.addf %76, %77 : vector<8x128xf32>
    %79 = arith.mulf %78, %8 : vector<8x128xf32>
    %80 = arith.negf %79 : vector<8x128xf32>
    %81 = math.exp %80 : vector<8x128xf32>
    %cst_31 = arith.constant 1.000000e+00 : f32
    %82 = vector.broadcast %cst_31 : f32 to vector<8x128xf32>
    %83 = arith.addf %82, %81 : vector<8x128xf32>
    %84 = arith.divf %82, %83 : vector<8x128xf32>
    %85 = arith.mulf %84, %8 : vector<8x128xf32>
    %86 = arith.addf %85, %11 : vector<8x128xf32>
    %87 = vector.extract_strided_slice %86 {offsets = [0, 0], sizes = [8, 32], strides = [1, 1]} : vector<8x128xf32> to vector<8x32xf32>
    %88 = vector.extract_strided_slice %86 {offsets = [0, 32], sizes = [8, 32], strides = [1, 1]} : vector<8x128xf32> to vector<8x32xf32>
    %89 = vector.extract_strided_slice %86 {offsets = [0, 64], sizes = [8, 32], strides = [1, 1]} : vector<8x128xf32> to vector<8x32xf32>
    %90 = vector.extract_strided_slice %86 {offsets = [0, 96], sizes = [8, 32], strides = [1, 1]} : vector<8x128xf32> to vector<8x32xf32>
    %91 = arith.mulf %88, %31 : vector<8x32xf32>
    %92 = arith.mulf %87, %89 : vector<8x32xf32>
    %93 = arith.addf %91, %92 : vector<8x32xf32>
    %94 = math.tanh %93 : vector<8x32xf32>
    %95 = arith.mulf %90, %94 : vector<8x32xf32>
    %c2 = arith.constant 2 : index
    %c0_32 = arith.constant 0 : index
    %96 = tpu.strided_load %arg10[%c2, %c0_32] {strides = array<i32: 8, 1>} : memref<64x128xf32, #tpu.memory_space<vmem>>, vector<8x128xf32>
    %97 = arith.truncf %73 : vector<8x32xf32> to vector<8x32xbf16>
    %cst_33 = arith.constant dense<0.000000e+00> : vector<8x128xf32>
    %98 = tpu.matmul %97, %13, %cst_33 {dimension_numbers = #tpu.dot_dimension_numbers<[1], [0], [0], [1], [0, 0, 1, 1], [], []>} : vector<8x32xbf16>, vector<32x128xbf16>, vector<8x128xf32> -> vector<8x128xf32>
    %99 = arith.addf %96, %98 : vector<8x128xf32>
    %100 = arith.mulf %99, %8 : vector<8x128xf32>
    %101 = arith.negf %100 : vector<8x128xf32>
    %102 = math.exp %101 : vector<8x128xf32>
    %cst_34 = arith.constant 1.000000e+00 : f32
    %103 = vector.broadcast %cst_34 : f32 to vector<8x128xf32>
    %104 = arith.addf %103, %102 : vector<8x128xf32>
    %105 = arith.divf %103, %104 : vector<8x128xf32>
    %106 = arith.mulf %105, %8 : vector<8x128xf32>
    %107 = arith.addf %106, %11 : vector<8x128xf32>
    %108 = vector.extract_strided_slice %107 {offsets = [0, 0], sizes = [8, 32], strides = [1, 1]} : vector<8x128xf32> to vector<8x32xf32>
    %109 = vector.extract_strided_slice %107 {offsets = [0, 32], sizes = [8, 32], strides = [1, 1]} : vector<8x128xf32> to vector<8x32xf32>
    %110 = vector.extract_strided_slice %107 {offsets = [0, 64], sizes = [8, 32], strides = [1, 1]} : vector<8x128xf32> to vector<8x32xf32>
    %111 = vector.extract_strided_slice %107 {offsets = [0, 96], sizes = [8, 32], strides = [1, 1]} : vector<8x128xf32> to vector<8x32xf32>
    %112 = arith.mulf %109, %71 : vector<8x32xf32>
    %113 = arith.mulf %108, %110 : vector<8x32xf32>
    %114 = arith.addf %112, %113 : vector<8x32xf32>
    %115 = math.tanh %114 : vector<8x32xf32>
    %116 = arith.mulf %111, %115 : vector<8x32xf32>
    %117 = tpu.concatenate %73, %95 in 1 : vector<8x32xf32>, vector<8x32xf32> -> vector<8x64xf32>
    %118 = arith.truncf %117 : vector<8x64xf32> to vector<8x64xbf16>
    %cst_35 = arith.constant dense<0.000000e+00> : vector<8x128xf32>
    %119 = tpu.matmul %118, %18, %cst_35 {dimension_numbers = #tpu.dot_dimension_numbers<[1], [0], [0], [1], [0, 0, 1, 1], [], []>} : vector<8x64xbf16>, vector<64x128xbf16>, vector<8x128xf32> -> vector<8x128xf32>
    %120 = vector.broadcast %19 : vector<1x128xf32> to vector<8x128xf32>
    %121 = arith.addf %119, %120 : vector<8x128xf32>
    %122 = arith.mulf %121, %8 : vector<8x128xf32>
    %123 = arith.negf %122 : vector<8x128xf32>
    %124 = math.exp %123 : vector<8x128xf32>
    %cst_36 = arith.constant 1.000000e+00 : f32
    %125 = vector.broadcast %cst_36 : f32 to vector<8x128xf32>
    %126 = arith.addf %125, %124 : vector<8x128xf32>
    %127 = arith.divf %125, %126 : vector<8x128xf32>
    %128 = arith.mulf %127, %8 : vector<8x128xf32>
    %129 = arith.addf %128, %11 : vector<8x128xf32>
    %130 = vector.extract_strided_slice %129 {offsets = [0, 0], sizes = [8, 32], strides = [1, 1]} : vector<8x128xf32> to vector<8x32xf32>
    %131 = vector.extract_strided_slice %129 {offsets = [0, 32], sizes = [8, 32], strides = [1, 1]} : vector<8x128xf32> to vector<8x32xf32>
    %132 = vector.extract_strided_slice %129 {offsets = [0, 64], sizes = [8, 32], strides = [1, 1]} : vector<8x128xf32> to vector<8x32xf32>
    %133 = vector.extract_strided_slice %129 {offsets = [0, 96], sizes = [8, 32], strides = [1, 1]} : vector<8x128xf32> to vector<8x32xf32>
    %134 = arith.mulf %131, %93 : vector<8x32xf32>
    %135 = arith.mulf %130, %132 : vector<8x32xf32>
    %136 = arith.addf %134, %135 : vector<8x32xf32>
    %137 = math.tanh %136 : vector<8x32xf32>
    %138 = arith.mulf %133, %137 : vector<8x32xf32>
    %c3 = arith.constant 3 : index
    %c0_37 = arith.constant 0 : index
    %139 = tpu.strided_load %arg10[%c3, %c0_37] {strides = array<i32: 8, 1>} : memref<64x128xf32, #tpu.memory_space<vmem>>, vector<8x128xf32>
    %140 = arith.truncf %116 : vector<8x32xf32> to vector<8x32xbf16>
    %cst_38 = arith.constant dense<0.000000e+00> : vector<8x128xf32>
    %141 = tpu.matmul %140, %13, %cst_38 {dimension_numbers = #tpu.dot_dimension_numbers<[1], [0], [0], [1], [0, 0, 1, 1], [], []>} : vector<8x32xbf16>, vector<32x128xbf16>, vector<8x128xf32> -> vector<8x128xf32>
    %142 = arith.addf %139, %141 : vector<8x128xf32>
    %143 = arith.mulf %142, %8 : vector<8x128xf32>
    %144 = arith.negf %143 : vector<8x128xf32>
    %145 = math.exp %144 : vector<8x128xf32>
    %cst_39 = arith.constant 1.000000e+00 : f32
    %146 = vector.broadcast %cst_39 : f32 to vector<8x128xf32>
    %147 = arith.addf %146, %145 : vector<8x128xf32>
    %148 = arith.divf %146, %147 : vector<8x128xf32>
    %149 = arith.mulf %148, %8 : vector<8x128xf32>
    %150 = arith.addf %149, %11 : vector<8x128xf32>
    %151 = vector.extract_strided_slice %150 {offsets = [0, 0], sizes = [8, 32], strides = [1, 1]} : vector<8x128xf32> to vector<8x32xf32>
    %152 = vector.extract_strided_slice %150 {offsets = [0, 32], sizes = [8, 32], strides = [1, 1]} : vector<8x128xf32> to vector<8x32xf32>
    %153 = vector.extract_strided_slice %150 {offsets = [0, 64], sizes = [8, 32], strides = [1, 1]} : vector<8x128xf32> to vector<8x32xf32>
    %154 = vector.extract_strided_slice %150 {offsets = [0, 96], sizes = [8, 32], strides = [1, 1]} : vector<8x128xf32> to vector<8x32xf32>
    %155 = arith.mulf %152, %114 : vector<8x32xf32>
    %156 = arith.mulf %151, %153 : vector<8x32xf32>
    %157 = arith.addf %155, %156 : vector<8x32xf32>
    %158 = math.tanh %157 : vector<8x32xf32>
    %159 = arith.mulf %154, %158 : vector<8x32xf32>
    %160 = tpu.concatenate %116, %138 in 1 : vector<8x32xf32>, vector<8x32xf32> -> vector<8x64xf32>
    %161 = arith.truncf %160 : vector<8x64xf32> to vector<8x64xbf16>
    %cst_40 = arith.constant dense<0.000000e+00> : vector<8x128xf32>
    %162 = tpu.matmul %161, %18, %cst_40 {dimension_numbers = #tpu.dot_dimension_numbers<[1], [0], [0], [1], [0, 0, 1, 1], [], []>} : vector<8x64xbf16>, vector<64x128xbf16>, vector<8x128xf32> -> vector<8x128xf32>
    %163 = vector.broadcast %19 : vector<1x128xf32> to vector<8x128xf32>
    %164 = arith.addf %162, %163 : vector<8x128xf32>
    %165 = arith.mulf %164, %8 : vector<8x128xf32>
    %166 = arith.negf %165 : vector<8x128xf32>
    %167 = math.exp %166 : vector<8x128xf32>
    %cst_41 = arith.constant 1.000000e+00 : f32
    %168 = vector.broadcast %cst_41 : f32 to vector<8x128xf32>
    %169 = arith.addf %168, %167 : vector<8x128xf32>
    %170 = arith.divf %168, %169 : vector<8x128xf32>
    %171 = arith.mulf %170, %8 : vector<8x128xf32>
    %172 = arith.addf %171, %11 : vector<8x128xf32>
    %173 = vector.extract_strided_slice %172 {offsets = [0, 0], sizes = [8, 32], strides = [1, 1]} : vector<8x128xf32> to vector<8x32xf32>
    %174 = vector.extract_strided_slice %172 {offsets = [0, 32], sizes = [8, 32], strides = [1, 1]} : vector<8x128xf32> to vector<8x32xf32>
    %175 = vector.extract_strided_slice %172 {offsets = [0, 64], sizes = [8, 32], strides = [1, 1]} : vector<8x128xf32> to vector<8x32xf32>
    %176 = vector.extract_strided_slice %172 {offsets = [0, 96], sizes = [8, 32], strides = [1, 1]} : vector<8x128xf32> to vector<8x32xf32>
    %177 = arith.mulf %174, %136 : vector<8x32xf32>
    %178 = arith.mulf %173, %175 : vector<8x32xf32>
    %179 = arith.addf %177, %178 : vector<8x32xf32>
    %180 = math.tanh %179 : vector<8x32xf32>
    %181 = arith.mulf %176, %180 : vector<8x32xf32>
    %c4 = arith.constant 4 : index
    %c0_42 = arith.constant 0 : index
    %182 = tpu.strided_load %arg10[%c4, %c0_42] {strides = array<i32: 8, 1>} : memref<64x128xf32, #tpu.memory_space<vmem>>, vector<8x128xf32>
    %183 = arith.truncf %159 : vector<8x32xf32> to vector<8x32xbf16>
    %cst_43 = arith.constant dense<0.000000e+00> : vector<8x128xf32>
    %184 = tpu.matmul %183, %13, %cst_43 {dimension_numbers = #tpu.dot_dimension_numbers<[1], [0], [0], [1], [0, 0, 1, 1], [], []>} : vector<8x32xbf16>, vector<32x128xbf16>, vector<8x128xf32> -> vector<8x128xf32>
    %185 = arith.addf %182, %184 : vector<8x128xf32>
    %186 = arith.mulf %185, %8 : vector<8x128xf32>
    %187 = arith.negf %186 : vector<8x128xf32>
    %188 = math.exp %187 : vector<8x128xf32>
    %cst_44 = arith.constant 1.000000e+00 : f32
    %189 = vector.broadcast %cst_44 : f32 to vector<8x128xf32>
    %190 = arith.addf %189, %188 : vector<8x128xf32>
    %191 = arith.divf %189, %190 : vector<8x128xf32>
    %192 = arith.mulf %191, %8 : vector<8x128xf32>
    %193 = arith.addf %192, %11 : vector<8x128xf32>
    %194 = vector.extract_strided_slice %193 {offsets = [0, 0], sizes = [8, 32], strides = [1, 1]} : vector<8x128xf32> to vector<8x32xf32>
    %195 = vector.extract_strided_slice %193 {offsets = [0, 32], sizes = [8, 32], strides = [1, 1]} : vector<8x128xf32> to vector<8x32xf32>
    %196 = vector.extract_strided_slice %193 {offsets = [0, 64], sizes = [8, 32], strides = [1, 1]} : vector<8x128xf32> to vector<8x32xf32>
    %197 = vector.extract_strided_slice %193 {offsets = [0, 96], sizes = [8, 32], strides = [1, 1]} : vector<8x128xf32> to vector<8x32xf32>
    %198 = arith.mulf %195, %157 : vector<8x32xf32>
    %199 = arith.mulf %194, %196 : vector<8x32xf32>
    %200 = arith.addf %198, %199 : vector<8x32xf32>
    %201 = math.tanh %200 : vector<8x32xf32>
    %202 = arith.mulf %197, %201 : vector<8x32xf32>
    %203 = tpu.concatenate %159, %181 in 1 : vector<8x32xf32>, vector<8x32xf32> -> vector<8x64xf32>
    %204 = arith.truncf %203 : vector<8x64xf32> to vector<8x64xbf16>
    %cst_45 = arith.constant dense<0.000000e+00> : vector<8x128xf32>
    %205 = tpu.matmul %204, %18, %cst_45 {dimension_numbers = #tpu.dot_dimension_numbers<[1], [0], [0], [1], [0, 0, 1, 1], [], []>} : vector<8x64xbf16>, vector<64x128xbf16>, vector<8x128xf32> -> vector<8x128xf32>
    %206 = vector.broadcast %19 : vector<1x128xf32> to vector<8x128xf32>
    %207 = arith.addf %205, %206 : vector<8x128xf32>
    %208 = arith.mulf %207, %8 : vector<8x128xf32>
    %209 = arith.negf %208 : vector<8x128xf32>
    %210 = math.exp %209 : vector<8x128xf32>
    %cst_46 = arith.constant 1.000000e+00 : f32
    %211 = vector.broadcast %cst_46 : f32 to vector<8x128xf32>
    %212 = arith.addf %211, %210 : vector<8x128xf32>
    %213 = arith.divf %211, %212 : vector<8x128xf32>
    %214 = arith.mulf %213, %8 : vector<8x128xf32>
    %215 = arith.addf %214, %11 : vector<8x128xf32>
    %216 = vector.extract_strided_slice %215 {offsets = [0, 0], sizes = [8, 32], strides = [1, 1]} : vector<8x128xf32> to vector<8x32xf32>
    %217 = vector.extract_strided_slice %215 {offsets = [0, 32], sizes = [8, 32], strides = [1, 1]} : vector<8x128xf32> to vector<8x32xf32>
    %218 = vector.extract_strided_slice %215 {offsets = [0, 64], sizes = [8, 32], strides = [1, 1]} : vector<8x128xf32> to vector<8x32xf32>
    %219 = vector.extract_strided_slice %215 {offsets = [0, 96], sizes = [8, 32], strides = [1, 1]} : vector<8x128xf32> to vector<8x32xf32>
    %220 = arith.mulf %217, %179 : vector<8x32xf32>
    %221 = arith.mulf %216, %218 : vector<8x32xf32>
    %222 = arith.addf %220, %221 : vector<8x32xf32>
    %223 = math.tanh %222 : vector<8x32xf32>
    %224 = arith.mulf %219, %223 : vector<8x32xf32>
    %c5 = arith.constant 5 : index
    %c0_47 = arith.constant 0 : index
    %225 = tpu.strided_load %arg10[%c5, %c0_47] {strides = array<i32: 8, 1>} : memref<64x128xf32, #tpu.memory_space<vmem>>, vector<8x128xf32>
    %226 = arith.truncf %202 : vector<8x32xf32> to vector<8x32xbf16>
    %cst_48 = arith.constant dense<0.000000e+00> : vector<8x128xf32>
    %227 = tpu.matmul %226, %13, %cst_48 {dimension_numbers = #tpu.dot_dimension_numbers<[1], [0], [0], [1], [0, 0, 1, 1], [], []>} : vector<8x32xbf16>, vector<32x128xbf16>, vector<8x128xf32> -> vector<8x128xf32>
    %228 = arith.addf %225, %227 : vector<8x128xf32>
    %229 = arith.mulf %228, %8 : vector<8x128xf32>
    %230 = arith.negf %229 : vector<8x128xf32>
    %231 = math.exp %230 : vector<8x128xf32>
    %cst_49 = arith.constant 1.000000e+00 : f32
    %232 = vector.broadcast %cst_49 : f32 to vector<8x128xf32>
    %233 = arith.addf %232, %231 : vector<8x128xf32>
    %234 = arith.divf %232, %233 : vector<8x128xf32>
    %235 = arith.mulf %234, %8 : vector<8x128xf32>
    %236 = arith.addf %235, %11 : vector<8x128xf32>
    %237 = vector.extract_strided_slice %236 {offsets = [0, 0], sizes = [8, 32], strides = [1, 1]} : vector<8x128xf32> to vector<8x32xf32>
    %238 = vector.extract_strided_slice %236 {offsets = [0, 32], sizes = [8, 32], strides = [1, 1]} : vector<8x128xf32> to vector<8x32xf32>
    %239 = vector.extract_strided_slice %236 {offsets = [0, 64], sizes = [8, 32], strides = [1, 1]} : vector<8x128xf32> to vector<8x32xf32>
    %240 = vector.extract_strided_slice %236 {offsets = [0, 96], sizes = [8, 32], strides = [1, 1]} : vector<8x128xf32> to vector<8x32xf32>
    %241 = arith.mulf %238, %200 : vector<8x32xf32>
    %242 = arith.mulf %237, %239 : vector<8x32xf32>
    %243 = arith.addf %241, %242 : vector<8x32xf32>
    %244 = math.tanh %243 : vector<8x32xf32>
    %245 = arith.mulf %240, %244 : vector<8x32xf32>
    %246 = tpu.concatenate %202, %224 in 1 : vector<8x32xf32>, vector<8x32xf32> -> vector<8x64xf32>
    %247 = arith.truncf %246 : vector<8x64xf32> to vector<8x64xbf16>
    %cst_50 = arith.constant dense<0.000000e+00> : vector<8x128xf32>
    %248 = tpu.matmul %247, %18, %cst_50 {dimension_numbers = #tpu.dot_dimension_numbers<[1], [0], [0], [1], [0, 0, 1, 1], [], []>} : vector<8x64xbf16>, vector<64x128xbf16>, vector<8x128xf32> -> vector<8x128xf32>
    %249 = vector.broadcast %19 : vector<1x128xf32> to vector<8x128xf32>
    %250 = arith.addf %248, %249 : vector<8x128xf32>
    %251 = arith.mulf %250, %8 : vector<8x128xf32>
    %252 = arith.negf %251 : vector<8x128xf32>
    %253 = math.exp %252 : vector<8x128xf32>
    %cst_51 = arith.constant 1.000000e+00 : f32
    %254 = vector.broadcast %cst_51 : f32 to vector<8x128xf32>
    %255 = arith.addf %254, %253 : vector<8x128xf32>
    %256 = arith.divf %254, %255 : vector<8x128xf32>
    %257 = arith.mulf %256, %8 : vector<8x128xf32>
    %258 = arith.addf %257, %11 : vector<8x128xf32>
    %259 = vector.extract_strided_slice %258 {offsets = [0, 0], sizes = [8, 32], strides = [1, 1]} : vector<8x128xf32> to vector<8x32xf32>
    %260 = vector.extract_strided_slice %258 {offsets = [0, 32], sizes = [8, 32], strides = [1, 1]} : vector<8x128xf32> to vector<8x32xf32>
    %261 = vector.extract_strided_slice %258 {offsets = [0, 64], sizes = [8, 32], strides = [1, 1]} : vector<8x128xf32> to vector<8x32xf32>
    %262 = vector.extract_strided_slice %258 {offsets = [0, 96], sizes = [8, 32], strides = [1, 1]} : vector<8x128xf32> to vector<8x32xf32>
    %263 = arith.mulf %260, %222 : vector<8x32xf32>
    %264 = arith.mulf %259, %261 : vector<8x32xf32>
    %265 = arith.addf %263, %264 : vector<8x32xf32>
    %266 = math.tanh %265 : vector<8x32xf32>
    %267 = arith.mulf %262, %266 : vector<8x32xf32>
    %c6 = arith.constant 6 : index
    %c0_52 = arith.constant 0 : index
    %268 = tpu.strided_load %arg10[%c6, %c0_52] {strides = array<i32: 8, 1>} : memref<64x128xf32, #tpu.memory_space<vmem>>, vector<8x128xf32>
    %269 = arith.truncf %245 : vector<8x32xf32> to vector<8x32xbf16>
    %cst_53 = arith.constant dense<0.000000e+00> : vector<8x128xf32>
    %270 = tpu.matmul %269, %13, %cst_53 {dimension_numbers = #tpu.dot_dimension_numbers<[1], [0], [0], [1], [0, 0, 1, 1], [], []>} : vector<8x32xbf16>, vector<32x128xbf16>, vector<8x128xf32> -> vector<8x128xf32>
    %271 = arith.addf %268, %270 : vector<8x128xf32>
    %272 = arith.mulf %271, %8 : vector<8x128xf32>
    %273 = arith.negf %272 : vector<8x128xf32>
    %274 = math.exp %273 : vector<8x128xf32>
    %cst_54 = arith.constant 1.000000e+00 : f32
    %275 = vector.broadcast %cst_54 : f32 to vector<8x128xf32>
    %276 = arith.addf %275, %274 : vector<8x128xf32>
    %277 = arith.divf %275, %276 : vector<8x128xf32>
    %278 = arith.mulf %277, %8 : vector<8x128xf32>
    %279 = arith.addf %278, %11 : vector<8x128xf32>
    %280 = vector.extract_strided_slice %279 {offsets = [0, 0], sizes = [8, 32], strides = [1, 1]} : vector<8x128xf32> to vector<8x32xf32>
    %281 = vector.extract_strided_slice %279 {offsets = [0, 32], sizes = [8, 32], strides = [1, 1]} : vector<8x128xf32> to vector<8x32xf32>
    %282 = vector.extract_strided_slice %279 {offsets = [0, 64], sizes = [8, 32], strides = [1, 1]} : vector<8x128xf32> to vector<8x32xf32>
    %283 = vector.extract_strided_slice %279 {offsets = [0, 96], sizes = [8, 32], strides = [1, 1]} : vector<8x128xf32> to vector<8x32xf32>
    %284 = arith.mulf %281, %243 : vector<8x32xf32>
    %285 = arith.mulf %280, %282 : vector<8x32xf32>
    %286 = arith.addf %284, %285 : vector<8x32xf32>
    %287 = math.tanh %286 : vector<8x32xf32>
    %288 = arith.mulf %283, %287 : vector<8x32xf32>
    %289 = tpu.concatenate %245, %267 in 1 : vector<8x32xf32>, vector<8x32xf32> -> vector<8x64xf32>
    %290 = arith.truncf %289 : vector<8x64xf32> to vector<8x64xbf16>
    %cst_55 = arith.constant dense<0.000000e+00> : vector<8x128xf32>
    %291 = tpu.matmul %290, %18, %cst_55 {dimension_numbers = #tpu.dot_dimension_numbers<[1], [0], [0], [1], [0, 0, 1, 1], [], []>} : vector<8x64xbf16>, vector<64x128xbf16>, vector<8x128xf32> -> vector<8x128xf32>
    %292 = vector.broadcast %19 : vector<1x128xf32> to vector<8x128xf32>
    %293 = arith.addf %291, %292 : vector<8x128xf32>
    %294 = arith.mulf %293, %8 : vector<8x128xf32>
    %295 = arith.negf %294 : vector<8x128xf32>
    %296 = math.exp %295 : vector<8x128xf32>
    %cst_56 = arith.constant 1.000000e+00 : f32
    %297 = vector.broadcast %cst_56 : f32 to vector<8x128xf32>
    %298 = arith.addf %297, %296 : vector<8x128xf32>
    %299 = arith.divf %297, %298 : vector<8x128xf32>
    %300 = arith.mulf %299, %8 : vector<8x128xf32>
    %301 = arith.addf %300, %11 : vector<8x128xf32>
    %302 = vector.extract_strided_slice %301 {offsets = [0, 0], sizes = [8, 32], strides = [1, 1]} : vector<8x128xf32> to vector<8x32xf32>
    %303 = vector.extract_strided_slice %301 {offsets = [0, 32], sizes = [8, 32], strides = [1, 1]} : vector<8x128xf32> to vector<8x32xf32>
    %304 = vector.extract_strided_slice %301 {offsets = [0, 64], sizes = [8, 32], strides = [1, 1]} : vector<8x128xf32> to vector<8x32xf32>
    %305 = vector.extract_strided_slice %301 {offsets = [0, 96], sizes = [8, 32], strides = [1, 1]} : vector<8x128xf32> to vector<8x32xf32>
    %306 = arith.mulf %303, %265 : vector<8x32xf32>
    %307 = arith.mulf %302, %304 : vector<8x32xf32>
    %308 = arith.addf %306, %307 : vector<8x32xf32>
    %309 = math.tanh %308 : vector<8x32xf32>
    %310 = arith.mulf %305, %309 : vector<8x32xf32>
    %c7 = arith.constant 7 : index
    %c0_57 = arith.constant 0 : index
    %311 = tpu.strided_load %arg10[%c7, %c0_57] {strides = array<i32: 8, 1>} : memref<64x128xf32, #tpu.memory_space<vmem>>, vector<8x128xf32>
    %312 = arith.truncf %288 : vector<8x32xf32> to vector<8x32xbf16>
    %cst_58 = arith.constant dense<0.000000e+00> : vector<8x128xf32>
    %313 = tpu.matmul %312, %13, %cst_58 {dimension_numbers = #tpu.dot_dimension_numbers<[1], [0], [0], [1], [0, 0, 1, 1], [], []>} : vector<8x32xbf16>, vector<32x128xbf16>, vector<8x128xf32> -> vector<8x128xf32>
    %314 = arith.addf %311, %313 : vector<8x128xf32>
    %315 = arith.mulf %314, %8 : vector<8x128xf32>
    %316 = arith.negf %315 : vector<8x128xf32>
    %317 = math.exp %316 : vector<8x128xf32>
    %cst_59 = arith.constant 1.000000e+00 : f32
    %318 = vector.broadcast %cst_59 : f32 to vector<8x128xf32>
    %319 = arith.addf %318, %317 : vector<8x128xf32>
    %320 = arith.divf %318, %319 : vector<8x128xf32>
    %321 = arith.mulf %320, %8 : vector<8x128xf32>
    %322 = arith.addf %321, %11 : vector<8x128xf32>
    %323 = vector.extract_strided_slice %322 {offsets = [0, 0], sizes = [8, 32], strides = [1, 1]} : vector<8x128xf32> to vector<8x32xf32>
    %324 = vector.extract_strided_slice %322 {offsets = [0, 32], sizes = [8, 32], strides = [1, 1]} : vector<8x128xf32> to vector<8x32xf32>
    %325 = vector.extract_strided_slice %322 {offsets = [0, 64], sizes = [8, 32], strides = [1, 1]} : vector<8x128xf32> to vector<8x32xf32>
    %326 = vector.extract_strided_slice %322 {offsets = [0, 96], sizes = [8, 32], strides = [1, 1]} : vector<8x128xf32> to vector<8x32xf32>
    %327 = arith.mulf %324, %286 : vector<8x32xf32>
    %328 = arith.mulf %323, %325 : vector<8x32xf32>
    %329 = arith.addf %327, %328 : vector<8x32xf32>
    %330 = math.tanh %329 : vector<8x32xf32>
    %331 = arith.mulf %326, %330 : vector<8x32xf32>
    %332 = tpu.concatenate %288, %310 in 1 : vector<8x32xf32>, vector<8x32xf32> -> vector<8x64xf32>
    %333 = arith.truncf %332 : vector<8x64xf32> to vector<8x64xbf16>
    %cst_60 = arith.constant dense<0.000000e+00> : vector<8x128xf32>
    %334 = tpu.matmul %333, %18, %cst_60 {dimension_numbers = #tpu.dot_dimension_numbers<[1], [0], [0], [1], [0, 0, 1, 1], [], []>} : vector<8x64xbf16>, vector<64x128xbf16>, vector<8x128xf32> -> vector<8x128xf32>
    %335 = vector.broadcast %19 : vector<1x128xf32> to vector<8x128xf32>
    %336 = arith.addf %334, %335 : vector<8x128xf32>
    %337 = arith.mulf %336, %8 : vector<8x128xf32>
    %338 = arith.negf %337 : vector<8x128xf32>
    %339 = math.exp %338 : vector<8x128xf32>
    %cst_61 = arith.constant 1.000000e+00 : f32
    %340 = vector.broadcast %cst_61 : f32 to vector<8x128xf32>
    %341 = arith.addf %340, %339 : vector<8x128xf32>
    %342 = arith.divf %340, %341 : vector<8x128xf32>
    %343 = arith.mulf %342, %8 : vector<8x128xf32>
    %344 = arith.addf %343, %11 : vector<8x128xf32>
    %345 = vector.extract_strided_slice %344 {offsets = [0, 0], sizes = [8, 32], strides = [1, 1]} : vector<8x128xf32> to vector<8x32xf32>
    %346 = vector.extract_strided_slice %344 {offsets = [0, 32], sizes = [8, 32], strides = [1, 1]} : vector<8x128xf32> to vector<8x32xf32>
    %347 = vector.extract_strided_slice %344 {offsets = [0, 64], sizes = [8, 32], strides = [1, 1]} : vector<8x128xf32> to vector<8x32xf32>
    %348 = vector.extract_strided_slice %344 {offsets = [0, 96], sizes = [8, 32], strides = [1, 1]} : vector<8x128xf32> to vector<8x32xf32>
    %349 = arith.mulf %346, %308 : vector<8x32xf32>
    %350 = arith.mulf %345, %347 : vector<8x32xf32>
    %351 = arith.addf %349, %350 : vector<8x32xf32>
    %352 = math.tanh %351 : vector<8x32xf32>
    %353 = arith.mulf %348, %352 : vector<8x32xf32>
    %354 = tpu.concatenate %331, %353 in 1 : vector<8x32xf32>, vector<8x32xf32> -> vector<8x64xf32>
    %355 = arith.truncf %354 : vector<8x64xf32> to vector<8x64xbf16>
    %cst_62 = arith.constant dense<0.000000e+00> : vector<8x128xf32>
    %356 = tpu.matmul %355, %18, %cst_62 {dimension_numbers = #tpu.dot_dimension_numbers<[1], [0], [0], [1], [0, 0, 1, 1], [], []>} : vector<8x64xbf16>, vector<64x128xbf16>, vector<8x128xf32> -> vector<8x128xf32>
    %357 = vector.broadcast %19 : vector<1x128xf32> to vector<8x128xf32>
    %358 = arith.addf %356, %357 : vector<8x128xf32>
    %359 = arith.mulf %358, %8 : vector<8x128xf32>
    %360 = arith.negf %359 : vector<8x128xf32>
    %361 = math.exp %360 : vector<8x128xf32>
    %cst_63 = arith.constant 1.000000e+00 : f32
    %362 = vector.broadcast %cst_63 : f32 to vector<8x128xf32>
    %363 = arith.addf %362, %361 : vector<8x128xf32>
    %364 = arith.divf %362, %363 : vector<8x128xf32>
    %365 = arith.mulf %364, %8 : vector<8x128xf32>
    %366 = arith.addf %365, %11 : vector<8x128xf32>
    %367 = vector.extract_strided_slice %366 {offsets = [0, 0], sizes = [8, 32], strides = [1, 1]} : vector<8x128xf32> to vector<8x32xf32>
    %368 = vector.extract_strided_slice %366 {offsets = [0, 32], sizes = [8, 32], strides = [1, 1]} : vector<8x128xf32> to vector<8x32xf32>
    %369 = vector.extract_strided_slice %366 {offsets = [0, 64], sizes = [8, 32], strides = [1, 1]} : vector<8x128xf32> to vector<8x32xf32>
    %370 = vector.extract_strided_slice %366 {offsets = [0, 96], sizes = [8, 32], strides = [1, 1]} : vector<8x128xf32> to vector<8x32xf32>
    %371 = arith.mulf %368, %351 : vector<8x32xf32>
    %372 = arith.mulf %367, %369 : vector<8x32xf32>
    %373 = arith.addf %371, %372 : vector<8x32xf32>
    %374 = math.tanh %373 : vector<8x32xf32>
    %375 = arith.mulf %370, %374 : vector<8x32xf32>
    %c0_64 = arith.constant 0 : index
    %c0_65 = arith.constant 0 : index
    %376 = vector.load %arg7[%c0_64, %c0_65] : memref<1x32xf32, #tpu.memory_space<vmem>>, vector<1x32xf32>
    %c0_66 = arith.constant 0 : index
    %c0_67 = arith.constant 0 : index
    %377 = vector.load %arg8[%c0_66, %c0_67] : memref<1x1xf32, #tpu.memory_space<vmem>>, vector<1x1xf32>
    %378 = vector.broadcast %376 : vector<1x32xf32> to vector<8x32xf32>
    %379 = arith.mulf %375, %378 : vector<8x32xf32>
    %cst_68 = arith.constant dense<0.000000e+00> : vector<8xf32>
    %380 = vector.multi_reduction <add>, %379, %cst_68 [1] : vector<8x32xf32> to vector<8xf32>
    %381 = vector.shape_cast %380 : vector<8xf32> to vector<8x1xf32>
    %382 = vector.broadcast %377 : vector<1x1xf32> to vector<8x1xf32>
    %383 = arith.addf %381, %382 : vector<8x1xf32>
    %384 = arith.negf %383 : vector<8x1xf32>
    %385 = math.exp %384 : vector<8x1xf32>
    %cst_69 = arith.constant 1.000000e+00 : f32
    %386 = vector.broadcast %cst_69 : f32 to vector<8x1xf32>
    %387 = arith.addf %386, %385 : vector<8x1xf32>
    %388 = arith.divf %386, %387 : vector<8x1xf32>
    %c0_70 = arith.constant 0 : index
    %c0_71 = arith.constant 0 : index
    %389 = vector.load %arg9[%c0_70, %c0_71] : memref<8x1xf32, #tpu.memory_space<vmem>>, vector<8x1xf32>
    tpu.vector_store %arg9[%c0_70, %c0_71], %388 {strides = array<i32>} : memref<8x1xf32, #tpu.memory_space<vmem>>, vector<8x1xf32>,
    return
  }
}

</mosaic_0001>

<llo_original>
// kernel: tpu_custom_call.1
$region0: #{tpu_custom_call.1}
  #allocation0 [shape = 'u32[]', space=smem, size = 0x4, offset = 0x4, fixed_abs, tag = 'smem constant byte address 0x4 - core index']
  #allocation1 [shape = 'u32[144,128]{1,0:T(1,128)}', space=vmem, size = 0x12000, scoped, tag = 'internal scratch']
  #allocation2 [shape = 'f32[64,128]{1,0:T(8,128)}', space=vmem, size = 0x8000, scoped, tag = 'scratch operand']
  #allocation3 [shape = 'f32[1,1]{1,0:T(1,128)S(1)}', space=vmem, size = 0x200, scoped, tag = 'scoped memory for tpu_custom_call.1']
  %s0 = inlined_call_operand.vmem [shape: f32[64,16], index: 0, kind: input, shape index: {}]
  %s1 = inlined_call_operand.hbm [shape: f32[16,128], index: 1, kind: input, shape index: {}]
  %s2 = inlined_call_operand.vmem [shape: f32[32,128], index: 2, kind: input, shape index: {}]
  %s3 = inlined_call_operand.vmem [shape: f32[1,128], index: 3, kind: input, shape index: {}]
  %s4 = inlined_call_operand.vmem [shape: f32[32,128], index: 4, kind: input, shape index: {}]
  %s5 = inlined_call_operand.vmem [shape: f32[32,128], index: 5, kind: input, shape index: {}]
  %s6 = inlined_call_operand.vmem [shape: f32[1,128], index: 6, kind: input, shape index: {}]
  %s7 = inlined_call_operand.vmem [shape: f32[1,32], index: 7, kind: input, shape index: {}]
  %s8 = inlined_call_operand.<no memory space> [shape: f32[1,1], index: 8, kind: input, shape index: {}]
  %s9 = inlined_call_operand.vmem [shape: f32[8,1], index: 9, kind: output, shape index: {}]
  %s10 = sld [smem:[#allocation0]]
  $region50: #{tpu_custom_call.1} parent=0
    _
  %s12 = ssub.s32 1, %s10
  %s13 = scalar_select 0, %s12, %s10
  %v14 = vstv %s8
  %15 = vst [vmem:[#allocation3] sm:$0x1] %v14
  $region1: #{tpu_custom_call.1} parent=0
    #allocation4 [shape = 'u8[8192]{0}', space=vmem, size = 0x2000, scoped, tag = 'input window, operand 1, single buffered']
    #allocation5 [shape = 's32[1]{0}', space=sflag, size = 0x4, scoped, tag = 'scoped memory for tpu_custom_call.1']
    %16 = vsyncpa [#allocation5], 0
    // Predicated region
    $region2: #{tpu_custom_call.1} parent=1 // pred_check
      _
    $region3: #{tpu_custom_call.1} parent=1 // pred_check_branch
      %18 = sbr.rel (0) target = $region5
    $region4: #{tpu_custom_call.1} parent=1 // pred_region
      _
    $region5: #{tpu_custom_call.1} parent=1 // pred_fallthru
      _
    // Predicated region
    $region6: #{tpu_custom_call.1} parent=1 // pred_check
      _
    $region7: #{tpu_custom_call.1} parent=1 // pred_check_branch
      %20 = sbr.rel (0) target = $region9
    $region8: #{tpu_custom_call.1} parent=1 // pred_region
      %s22 = ssub.s32 256, 256
      %23 = vsyncadd [#allocation5], %s22
      %s24 = sshll.u32 [#allocation4], 4
      %s25 = int_to_ptr.vmem [resolvable:$true] %s24
      %30 = dma.hbm_to_vmem [thread:$0]  %s1, 256, %s25, [#allocation5], 128, 128, 8
    $region9: #{tpu_custom_call.1} parent=1 // pred_fallthru
      _
    // Predicated region
    $region10: #{tpu_custom_call.1} parent=1 // pred_check
      _
    $region11: #{tpu_custom_call.1} parent=1 // pred_check_branch
      %32 = sbr.rel (0) target = $region13
    $region12: #{tpu_custom_call.1} parent=1 // pred_region
      _
    $region13: #{tpu_custom_call.1} parent=1 // pred_fallthru
      _
    // Predicated region
    $region14: #{tpu_custom_call.1} parent=1 // pred_check
      _
    $region15: #{tpu_custom_call.1} parent=1 // pred_check_branch
      %34 = sbr.rel (0) target = $region17
    $region16: #{tpu_custom_call.1} parent=1 // pred_region
      _
    $region17: #{tpu_custom_call.1} parent=1 // pred_fallthru
      _
    // Predicated region
    $region18: #{tpu_custom_call.1} parent=1 // pred_check
      _
    $region19: #{tpu_custom_call.1} parent=1 // pred_check_branch
      %36 = sbr.rel (0) target = $region21
    $region20: #{tpu_custom_call.1} parent=1 // pred_region
      _
    $region21: #{tpu_custom_call.1} parent=1 // pred_fallthru
      _
    // Predicated region
    $region22: #{tpu_custom_call.1} parent=1 // pred_check
      _
    $region23: #{tpu_custom_call.1} parent=1 // pred_check_branch
      %38 = sbr.rel (0) target = $region25
    $region24: #{tpu_custom_call.1} parent=1 // pred_region
      _
    $region25: #{tpu_custom_call.1} parent=1 // pred_fallthru
      _
    // Predicated region
    $region26: #{tpu_custom_call.1} parent=1 // pred_check
      _
    $region27: #{tpu_custom_call.1} parent=1 // pred_check_branch
      %40 = sbr.rel (0) target = $region29
    $region28: #{tpu_custom_call.1} parent=1 // pred_region
      _
    $region29: #{tpu_custom_call.1} parent=1 // pred_fallthru
      _
    // Predicated region
    $region30: #{tpu_custom_call.1} parent=1 // pred_check
      _
    $region31: #{tpu_custom_call.1} parent=1 // pred_check_branch
      %42 = sbr.rel (0) target = $region33
    $region32: #{tpu_custom_call.1} parent=1 // pred_region
      _
    $region33: #{tpu_custom_call.1} parent=1 // pred_fallthru
      _
    // Predicated region
    $region34: #{tpu_custom_call.1} parent=1 // pred_check
      _
    $region35: #{tpu_custom_call.1} parent=1 // pred_check_branch
      %44 = sbr.rel (0) target = $region37
    $region36: #{tpu_custom_call.1} parent=1 // pred_region
      _
    $region37: #{tpu_custom_call.1} parent=1 // pred_fallthru
      _
    // Predicated region
    $region38: #{tpu_custom_call.1} parent=1 // pred_check
      _
    $region39: #{tpu_custom_call.1} parent=1 // pred_check_branch
      %46 = sbr.rel (0) target = $region41
    $region40: #{tpu_custom_call.1} parent=1 // pred_region
      %47 = dma.done [#allocation5], 256
    $region41: #{tpu_custom_call.1} parent=1 // pred_fallthru
      _
    %v49 = vlaneseq
    %v50 = vand.u32 %v49, 127
    %vm51 = vcmp.ge.s32.totalorder %v50, 64
    %vm52 = vcmp.lt.s32.totalorder %v50, 96
    %vm53 = vmand %vm51, %vm52
    %v54 = vsel %vm53, 2.0, 1.0
    %v55 = vsel %vm53, -1.0, 0.0
    %v56 = vld [vmem:[%s2] sm:$0xff]
    %v57 = vld [vmem:[%s2 + $0x8] sm:$0xff]
    %v58 = vld [vmem:[%s2 + $0x10] sm:$0xff]
    %v59 = vld [vmem:[%s2 + $0x18] sm:$0xff]
    %v60 = vpack.c.bf16 %v57, %v56
    %v61 = vpack.c.bf16 %v59, %v58
    %v62 = vld [vmem:[%s3] sm:$0x1]
    %v63 = vld [vmem:[%s4] sm:$0xff]
    %v64 = vld [vmem:[%s4 + $0x8] sm:$0xff]
    %v65 = vld [vmem:[%s4 + $0x10] sm:$0xff]
    %v66 = vld [vmem:[%s4 + $0x18] sm:$0xff]
    %v67 = vld [vmem:[%s5] sm:$0xff]
    %v68 = vld [vmem:[%s5 + $0x8] sm:$0xff]
    %v69 = vld [vmem:[%s5 + $0x10] sm:$0xff]
    %v70 = vld [vmem:[%s5 + $0x18] sm:$0xff]
    %v71 = vpack.c.bf16 %v64, %v63
    %v72 = vpack.c.bf16 %v66, %v65
    %v73 = vpack.c.bf16 %v68, %v67
    %v74 = vpack.c.bf16 %v70, %v69
    %v75 = vld [vmem:[%s6] sm:$0x1]
    %v76 = vld [vmem:[#allocation4] sm:$0xff]
    %v77 = vld [vmem:[#allocation4 + $0x8] sm:$0xff]
    %v78 = vld [vmem:[%s0] sm:$0xff]
    %v79 = vld [vmem:[%s0 + $0x8] sm:$0xff]
    %v80 = vld [vmem:[%s0 + $0x10] sm:$0xff]
    %v81 = vld [vmem:[%s0 + $0x18] sm:$0xff]
    %v82 = vld [vmem:[%s0 + $0x20] sm:$0xff]
    %v83 = vld [vmem:[%s0 + $0x28] sm:$0xff]
    %v84 = vld [vmem:[%s0 + $0x30] sm:$0xff]
    %v85 = vld [vmem:[%s0 + $0x38] sm:$0xff]
    %v86 = vpack.c.bf16 %v79, %v78
    %v87 = vpack.c.bf16 %v81, %v80
    %v88 = vpack.c.bf16 %v83, %v82
    %v89 = vpack.c.bf16 %v85, %v84
    %v90 = vpack.c.bf16 %v77, %v76
    %v92 = vlaneseq
    %v93 = vshrl.u32 %v92, 7
    %v94 = vsub.s32 0, %v93
    %v95 = vrot.slane %v62, %v94
    %vm97 = vcmask 130048
    %v99 = vsel %vm97, %v86, 0
    %v102 = vsel %vm97, %v87, 0
    %v105 = vsel %vm97, %v88, 0
    %v108 = vsel %vm97, %v89, 0
    %110 = vmatprep.subr.bf16.mxu0 0
    %111 = vmatpush1.bf16.msra.mxu0 %v90
    %112 = vmatprep.subr.bf16.mxu0 0
    %113 = vmatpush1.bf16.msra.mxu0 0
    %114 = vmatprep.subr.bf16.mxu0 0
    %115 = vmatpush1.bf16.msra.mxu0 0
    %116 = vmatprep.subr.bf16.mxu0 0
    %117 = vmatpush1.bf16.msra.mxu0 0
    %118 = vmatprep.subr.bf16.mxu0 0
    %119 = vmatpush1.bf16.msra.mxu0 0
    %120 = vmatprep.subr.bf16.mxu0 0
    %121 = vmatpush1.bf16.msra.mxu0 0
    %122 = vmatprep.subr.bf16.mxu0 0
    %123 = vmatpush1.bf16.msra.mxu0 0
    %124 = vmatprep.subr.bf16.mxu0 0
    %125 = vmatpush1.bf16.msra.mxu0 0
    %126 = vmatprep.subr.bf16.mxu0 0
    %127 = vmatpush1.bf16.msra.mxu0 0
    %128 = vmatprep.subr.bf16.mxu0 0
    %129 = vmatpush1.bf16.msra.mxu0 0
    %130 = vmatprep.subr.bf16.mxu0 0
    %131 = vmatpush1.bf16.msra.mxu0 0
    %132 = vmatprep.subr.bf16.mxu0 0
    %133 = vmatpush1.bf16.msra.mxu0 0
    %134 = vmatprep.subr.bf16.mxu0 0
    %135 = vmatpush1.bf16.msra.mxu0 0
    %136 = vmatprep.subr.bf16.mxu0 0
    %137 = vmatpush1.bf16.msra.mxu0 0
    %138 = vmatprep.subr.bf16.mxu0 0
    %139 = vmatpush1.bf16.msra.mxu0 0
    %140 = vmatprep.subr.bf16.mxu0 0
    %141 = vmatpush1.bf16.msra.mxu0 0
    %142 = vmatprep.mubr.bf16.mxu0 0
    %143 = vmatmul.mubr.bf16.gmra.mrb[0].mxu0 %v99
    %v144 = vpop.f32.mrb[0].mxu0
    %v145 = vadd.f32 %v95, %v144
    %v146 = vpop.f32.mrb[0].mxu0
    %v147 = vpop.f32.mrb[0].mxu0
    %v148 = vadd.f32 %v95, %v147
    %v149 = vpop.f32.mrb[0].mxu0
    %150 = vmatprep.mubr.bf16.mxu0 0
    %151 = vmatmul.mubr.bf16.gmra.mrb[0].mxu0 %v102
    %v152 = vpop.f32.mrb[0].mxu0
    %v153 = vadd.f32 %v95, %v152
    %v154 = vpop.f32.mrb[0].mxu0
    %v155 = vpop.f32.mrb[0].mxu0
    %v156 = vadd.f32 %v95, %v155
    %v157 = vpop.f32.mrb[0].mxu0
    %158 = vmatprep.mubr.bf16.mxu0 0
    %159 = vmatmul.mubr.bf16.gmra.mrb[0].mxu0 %v105
    %v160 = vpop.f32.mrb[0].mxu0
    %v161 = vadd.f32 %v95, %v160
    %v162 = vpop.f32.mrb[0].mxu0
    %v163 = vpop.f32.mrb[0].mxu0
    %v164 = vadd.f32 %v95, %v163
    %v165 = vpop.f32.mrb[0].mxu0
    %166 = vmatprep.mubr.bf16.mxu0 0
    %167 = vmatmul.mubr.bf16.gmra.mrb[0].mxu0 %v108
    %v168 = vpop.f32.mrb[0].mxu0
    %v169 = vadd.f32 %v95, %v168
    %v170 = vpop.f32.mrb[0].mxu0
    %v171 = vpop.f32.mrb[0].mxu0
    %v172 = vadd.f32 %v95, %v171
    %v173 = vpop.f32.mrb[0].mxu0
    %174 = vdwg.mxu0
    %175 = vst [vmem:[#allocation2] sm:$0xff] %v145
    %176 = vst [vmem:[#allocation2 + $0x8] sm:$0xff] %v148
    %177 = vst [vmem:[#allocation2 + $0x10] sm:$0xff] %v153
    %178 = vst [vmem:[#allocation2 + $0x18] sm:$0xff] %v156
    %179 = vst [vmem:[#allocation2 + $0x20] sm:$0xff] %v161
    %180 = vst [vmem:[#allocation2 + $0x28] sm:$0xff] %v164
    %181 = vst [vmem:[#allocation2 + $0x30] sm:$0xff] %v169
    %182 = vst [vmem:[#allocation2 + $0x38] sm:$0xff] %v172
    %v183 = vld [vmem:[#allocation2] ss:$8 sm:$0xf]
    %v184 = vld [vmem:[#allocation2] ss:$8 sm:$0xf0]
    %v185 = vor.u32 %v183, %v184
    %vm186 = vcmask 261120
    %v188 = vsel %vm186, 0, 0
    %190 = vmatprep.subr.bf16.mxu0 0
    %191 = vmatpush1.bf16.msra.mxu0 %v60
    %192 = vmatprep.subr.bf16.mxu0 0
    %193 = vmatpush1.bf16.msra.mxu0 %v61
    %194 = vmatprep.subr.bf16.mxu0 0
    %195 = vmatpush1.bf16.msra.mxu0 0
    %196 = vmatprep.subr.bf16.mxu0 0
    %197 = vmatpush1.bf16.msra.mxu0 0
    %198 = vmatprep.subr.bf16.mxu0 0
    %199 = vmatpush1.bf16.msra.mxu0 0
    %200 = vmatprep.subr.bf16.mxu0 0
    %201 = vmatpush1.bf16.msra.mxu0 0
    %202 = vmatprep.subr.bf16.mxu0 0
    %203 = vmatpush1.bf16.msra.mxu0 0
    %204 = vmatprep.subr.bf16.mxu0 0
    %205 = vmatpush1.bf16.msra.mxu0 0
    %206 = vmatprep.subr.bf16.mxu0 0
    %207 = vmatpush1.bf16.msra.mxu0 0
    %208 = vmatprep.subr.bf16.mxu0 0
    %209 = vmatpush1.bf16.msra.mxu0 0
    %210 = vmatprep.subr.bf16.mxu0 0
    %211 = vmatpush1.bf16.msra.mxu0 0
    %212 = vmatprep.subr.bf16.mxu0 0
    %213 = vmatpush1.bf16.msra.mxu0 0
    %214 = vmatprep.subr.bf16.mxu0 0
    %215 = vmatpush1.bf16.msra.mxu0 0
    %216 = vmatprep.subr.bf16.mxu0 0
    %217 = vmatpush1.bf16.msra.mxu0 0
    %218 = vmatprep.subr.bf16.mxu0 0
    %219 = vmatpush1.bf16.msra.mxu0 0
    %220 = vmatprep.subr.bf16.mxu0 0
    %221 = vmatpush1.bf16.msra.mxu0 0
    %222 = vmatprep.mubr.bf16.mxu0 0
    %223 = vmatmul.mubr.bf16.gmra.mrb[0].mxu0 %v188
    %v224 = vpop.f32.mrb[0].mxu0
    %v225 = vadd.f32 0.0, %v224
    %v226 = vpop.f32.mrb[0].mxu0
    %v227 = vpop.f32.mrb[0].mxu0
    %v228 = vpop.f32.mrb[0].mxu0
    %229 = vdwg.mxu0
    %v230 = vadd.f32 %v185, %v225
    %v231 = vmul.f32 %v230, %v54
    %v232 = vxor.u32 %v231, 2147483648
    %v233 = vmul.f32 %v232, 1.442695
    %v234 = vpow.pop %v233
    %v235 = vadd.f32 %v234, 1.0
    %v236 = vrcp.pop %v235
    %v237 = vmul.f32 1.0, %v236
    %v238 = vmul.f32 %v237, %v54
    %v239 = vadd.f32 %v238, %v55
    %v240 = vmul.f32 %v239, 0.0
    %242 = vrot.lane.b32.xlu0 %v239, 64
    %v243 = vpop.permute.xlu0 %242
    %v245 = vmul.f32 %v239, %v243
    %247 = vrot.lane.b32.xlu0 %v245, 32
    %v248 = vpop.permute.xlu0 %247
    %v250 = vadd.f32 %v240, %v248
    %v251 = vtanh.pop %v250
    %253 = vrot.lane.b32.xlu0 %v251, 64
    %v254 = vpop.permute.xlu0 %253
    %v256 = vmul.f32 %v239, %v254
    %s257 = scalar_lea.vmem [#allocation2], 1
    %v258 = vld [vmem:[%s257] ss:$8 sm:$0xf]
    %v259 = vld [vmem:[%s257] ss:$8 sm:$0xf0]
    %v260 = vor.u32 %v258, %v259
    %v261 = vpack.c.bf16 %v256, %v256
    %263 = vrot.lane.b32.xlu0 %v261, 32
    %v264 = vpop.permute.xlu0 %263
    %v266 = vsel %vm186, %v264, 0
    %268 = vmatprep.subr.bf16.mxu0 0
    %269 = vmatpush1.bf16.msra.mxu0 %v60
    %270 = vmatprep.subr.bf16.mxu0 0
    %271 = vmatpush1.bf16.msra.mxu0 %v61
    %272 = vmatprep.subr.bf16.mxu0 0
    %273 = vmatpush1.bf16.msra.mxu0 0
    %274 = vmatprep.subr.bf16.mxu0 0
    %275 = vmatpush1.bf16.msra.mxu0 0
    %276 = vmatprep.subr.bf16.mxu0 0
    %277 = vmatpush1.bf16.msra.mxu0 0
    %278 = vmatprep.subr.bf16.mxu0 0
    %279 = vmatpush1.bf16.msra.mxu0 0
    %280 = vmatprep.subr.bf16.mxu0 0
    %281 = vmatpush1.bf16.msra.mxu0 0
    %282 = vmatprep.subr.bf16.mxu0 0
    %283 = vmatpush1.bf16.msra.mxu0 0
    %284 = vmatprep.subr.bf16.mxu0 0
    %285 = vmatpush1.bf16.msra.mxu0 0
    %286 = vmatprep.subr.bf16.mxu0 0
    %287 = vmatpush1.bf16.msra.mxu0 0
    %288 = vmatprep.subr.bf16.mxu0 0
    %289 = vmatpush1.bf16.msra.mxu0 0
    %290 = vmatprep.subr.bf16.mxu0 0
    %291 = vmatpush1.bf16.msra.mxu0 0
    %292 = vmatprep.subr.bf16.mxu0 0
    %293 = vmatpush1.bf16.msra.mxu0 0
    %294 = vmatprep.subr.bf16.mxu0 0
    %295 = vmatpush1.bf16.msra.mxu0 0
    %296 = vmatprep.subr.bf16.mxu0 0
    %297 = vmatpush1.bf16.msra.mxu0 0
    %298 = vmatprep.subr.bf16.mxu0 0
    %299 = vmatpush1.bf16.msra.mxu0 0
    %300 = vmatprep.mubr.bf16.mxu0 0
    %301 = vmatmul.mubr.bf16.gmra.mrb[0].mxu0 %v266
    %v302 = vpop.f32.mrb[0].mxu0
    %v303 = vadd.f32 0.0, %v302
    %v304 = vpop.f32.mrb[0].mxu0
    %v305 = vpop.f32.mrb[0].mxu0
    %v306 = vpop.f32.mrb[0].mxu0
    %307 = vdwg.mxu0
    %v308 = vadd.f32 %v260, %v303
    %v309 = vmul.f32 %v308, %v54
    %v310 = vxor.u32 %v309, 2147483648
    %v311 = vmul.f32 %v310, 1.442695
    %v312 = vpow.pop %v311
    %v313 = vadd.f32 %v312, 1.0
    %v314 = vrcp.pop %v313
    %v315 = vmul.f32 1.0, %v314
    %v316 = vmul.f32 %v315, %v54
    %v317 = vadd.f32 %v316, %v55
    %v318 = vmul.f32 %v317, %v250
    %320 = vrot.lane.b32.xlu0 %v317, 64
    %v321 = vpop.permute.xlu0 %320
    %v323 = vmul.f32 %v317, %v321
    %325 = vrot.lane.b32.xlu0 %v323, 32
    %v326 = vpop.permute.xlu0 %325
    %v328 = vadd.f32 %v318, %v326
    %v329 = vtanh.pop %v328
    %331 = vrot.lane.b32.xlu0 %v329, 64
    %v332 = vpop.permute.xlu0 %331
    %v334 = vmul.f32 %v317, %v332
    %336 = vrot.lane.b32.xlu0 %v256, 32
    %v337 = vpop.permute.xlu0 %336
    %v339 = vsel %vm186, %v337, 0.0
    %v340 = vpack.c.bf16 %v339, %v339
    %v342 = vlaneseq
    %v343 = vshrl.u32 %v342, 7
    %v344 = vsub.s32 0, %v343
    %v345 = vrot.slane %v75, %v344
    %vm347 = vcmask 523264
    %v349 = vsel %vm347, %v340, 0
    %351 = vmatprep.subr.bf16.mxu0 0
    %352 = vmatpush1.bf16.msra.mxu0 %v71
    %353 = vmatprep.subr.bf16.mxu0 0
    %354 = vmatpush1.bf16.msra.mxu0 %v72
    %355 = vmatprep.subr.bf16.mxu0 0
    %356 = vmatpush1.bf16.msra.mxu0 %v73
    %357 = vmatprep.subr.bf16.mxu0 0
    %358 = vmatpush1.bf16.msra.mxu0 %v74
    %359 = vmatprep.subr.bf16.mxu0 0
    %360 = vmatpush1.bf16.msra.mxu0 0
    %361 = vmatprep.subr.bf16.mxu0 0
    %362 = vmatpush1.bf16.msra.mxu0 0
    %363 = vmatprep.subr.bf16.mxu0 0
    %364 = vmatpush1.bf16.msra.mxu0 0
    %365 = vmatprep.subr.bf16.mxu0 0
    %366 = vmatpush1.bf16.msra.mxu0 0
    %367 = vmatprep.subr.bf16.mxu0 0
    %368 = vmatpush1.bf16.msra.mxu0 0
    %369 = vmatprep.subr.bf16.mxu0 0
    %370 = vmatpush1.bf16.msra.mxu0 0
    %371 = vmatprep.subr.bf16.mxu0 0
    %372 = vmatpush1.bf16.msra.mxu0 0
    %373 = vmatprep.subr.bf16.mxu0 0
    %374 = vmatpush1.bf16.msra.mxu0 0
    %375 = vmatprep.subr.bf16.mxu0 0
    %376 = vmatpush1.bf16.msra.mxu0 0
    %377 = vmatprep.subr.bf16.mxu0 0
    %378 = vmatpush1.bf16.msra.mxu0 0
    %379 = vmatprep.subr.bf16.mxu0 0
    %380 = vmatpush1.bf16.msra.mxu0 0
    %381 = vmatprep.subr.bf16.mxu0 0
    %382 = vmatpush1.bf16.msra.mxu0 0
    %383 = vmatprep.mubr.bf16.mxu0 0
    %384 = vmatmul.mubr.bf16.gmra.mrb[0].mxu0 %v349
    %v385 = vpop.f32.mrb[0].mxu0
    %v386 = vadd.f32 %v345, %v385
    %v387 = vpop.f32.mrb[0].mxu0
    %v388 = vpop.f32.mrb[0].mxu0
    %v389 = vpop.f32.mrb[0].mxu0
    %390 = vdwg.mxu0
    %v391 = vmul.f32 %v386, %v54
    %v392 = vxor.u32 %v391, 2147483648
    %v393 = vmul.f32 %v392, 1.442695
    %v394 = vpow.pop %v393
    %v395 = vadd.f32 %v394, 1.0
    %v396 = vrcp.pop %v395
    %v397 = vmul.f32 1.0, %v396
    %v398 = vmul.f32 %v397, %v54
    %v399 = vadd.f32 %v398, %v55
    %v400 = vmul.f32 %v399, 0.0
    %402 = vrot.lane.b32.xlu0 %v399, 64
    %v403 = vpop.permute.xlu0 %402
    %v405 = vmul.f32 %v399, %v403
    %407 = vrot.lane.b32.xlu0 %v405, 32
    %v408 = vpop.permute.xlu0 %407
    %v410 = vadd.f32 %v400, %v408
    %v411 = vtanh.pop %v410
    %413 = vrot.lane.b32.xlu0 %v411, 64
    %v414 = vpop.permute.xlu0 %413
    %v416 = vmul.f32 %v399, %v414
    %s417 = scalar_lea.vmem [#allocation2], 2
    %v418 = vld [vmem:[%s417] ss:$8 sm:$0xf]
    %v419 = vld [vmem:[%s417] ss:$8 sm:$0xf0]
    %v420 = vor.u32 %v418, %v419
    %v421 = vpack.c.bf16 %v334, %v334
    %423 = vrot.lane.b32.xlu0 %v421, 32
    %v424 = vpop.permute.xlu0 %423
    %v426 = vsel %vm186, %v424, 0
    %428 = vmatprep.subr.bf16.mxu0 0
    %429 = vmatpush1.bf16.msra.mxu0 %v60
    %430 = vmatprep.subr.bf16.mxu0 0
    %431 = vmatpush1.bf16.msra.mxu0 %v61
    %432 = vmatprep.subr.bf16.mxu0 0
    %433 = vmatpush1.bf16.msra.mxu0 0
    %434 = vmatprep.subr.bf16.mxu0 0
    %435 = vmatpush1.bf16.msra.mxu0 0
    %436 = vmatprep.subr.bf16.mxu0 0
    %437 = vmatpush1.bf16.msra.mxu0 0
    %438 = vmatprep.subr.bf16.mxu0 0
    %439 = vmatpush1.bf16.msra.mxu0 0
    %440 = vmatprep.subr.bf16.mxu0 0
    %441 = vmatpush1.bf16.msra.mxu0 0
    %442 = vmatprep.subr.bf16.mxu0 0
    %443 = vmatpush1.bf16.msra.mxu0 0
    %444 = vmatprep.subr.bf16.mxu0 0
    %445 = vmatpush1.bf16.msra.mxu0 0
    %446 = vmatprep.subr.bf16.mxu0 0
    %447 = vmatpush1.bf16.msra.mxu0 0
    %448 = vmatprep.subr.bf16.mxu0 0
    %449 = vmatpush1.bf16.msra.mxu0 0
    %450 = vmatprep.subr.bf16.mxu0 0
    %451 = vmatpush1.bf16.msra.mxu0 0
    %452 = vmatprep.subr.bf16.mxu0 0
    %453 = vmatpush1.bf16.msra.mxu0 0
    %454 = vmatprep.subr.bf16.mxu0 0
    %455 = vmatpush1.bf16.msra.mxu0 0
    %456 = vmatprep.subr.bf16.mxu0 0
    %457 = vmatpush1.bf16.msra.mxu0 0
    %458 = vmatprep.subr.bf16.mxu0 0
    %459 = vmatpush1.bf16.msra.mxu0 0
    %460 = vmatprep.mubr.bf16.mxu0 0
    %461 = vmatmul.mubr.bf16.gmra.mrb[0].mxu0 %v426
    %v462 = vpop.f32.mrb[0].mxu0
    %v463 = vadd.f32 0.0, %v462
    %v464 = vpop.f32.mrb[0].mxu0
    %v465 = vpop.f32.mrb[0].mxu0
    %v466 = vpop.f32.mrb[0].mxu0
    %467 = vdwg.mxu0
    %v468 = vadd.f32 %v420, %v463
    %v469 = vmul.f32 %v468, %v54
    %v470 = vxor.u32 %v469, 2147483648
    %v471 = vmul.f32 %v470, 1.442695
    %v472 = vpow.pop %v471
    %v473 = vadd.f32 %v472, 1.0
    %v474 = vrcp.pop %v473
    %v475 = vmul.f32 1.0, %v474
    %v476 = vmul.f32 %v475, %v54
    %v477 = vadd.f32 %v476, %v55
    %v478 = vmul.f32 %v477, %v328
    %480 = vrot.lane.b32.xlu0 %v477, 64
    %v481 = vpop.permute.xlu0 %480
    %v483 = vmul.f32 %v477, %v481
    %485 = vrot.lane.b32.xlu0 %v483, 32
    %v486 = vpop.permute.xlu0 %485
    %v488 = vadd.f32 %v478, %v486
    %v489 = vtanh.pop %v488
    %491 = vrot.lane.b32.xlu0 %v489, 64
    %v492 = vpop.permute.xlu0 %491
    %v494 = vmul.f32 %v477, %v492
    %496 = vrot.lane.b32.xlu0 %v334, 32
    %v497 = vpop.permute.xlu0 %496
    %500 = vrot.lane.b32.xlu0 %v416, 64
    %v501 = vpop.permute.xlu0 %500
    %v503 = vsel %vm186, %v497, %v501
    %v504 = vpack.c.bf16 %v503, %v503
    %v506 = vsel %vm347, %v504, 0
    %508 = vmatprep.subr.bf16.mxu0 0
    %509 = vmatpush1.bf16.msra.mxu0 %v71
    %510 = vmatprep.subr.bf16.mxu0 0
    %511 = vmatpush1.bf16.msra.mxu0 %v72
    %512 = vmatprep.subr.bf16.mxu0 0
    %513 = vmatpush1.bf16.msra.mxu0 %v73
    %514 = vmatprep.subr.bf16.mxu0 0
    %515 = vmatpush1.bf16.msra.mxu0 %v74
    %516 = vmatprep.subr.bf16.mxu0 0
    %517 = vmatpush1.bf16.msra.mxu0 0
    %518 = vmatprep.subr.bf16.mxu0 0
    %519 = vmatpush1.bf16.msra.mxu0 0
    %520 = vmatprep.subr.bf16.mxu0 0
    %521 = vmatpush1.bf16.msra.mxu0 0
    %522 = vmatprep.subr.bf16.mxu0 0
    %523 = vmatpush1.bf16.msra.mxu0 0
    %524 = vmatprep.subr.bf16.mxu0 0
    %525 = vmatpush1.bf16.msra.mxu0 0
    %526 = vmatprep.subr.bf16.mxu0 0
    %527 = vmatpush1.bf16.msra.mxu0 0
    %528 = vmatprep.subr.bf16.mxu0 0
    %529 = vmatpush1.bf16.msra.mxu0 0
    %530 = vmatprep.subr.bf16.mxu0 0
    %531 = vmatpush1.bf16.msra.mxu0 0
    %532 = vmatprep.subr.bf16.mxu0 0
    %533 = vmatpush1.bf16.msra.mxu0 0
    %534 = vmatprep.subr.bf16.mxu0 0
    %535 = vmatpush1.bf16.msra.mxu0 0
    %536 = vmatprep.subr.bf16.mxu0 0
    %537 = vmatpush1.bf16.msra.mxu0 0
    %538 = vmatprep.subr.bf16.mxu0 0
    %539 = vmatpush1.bf16.msra.mxu0 0
    %540 = vmatprep.mubr.bf16.mxu0 0
    %541 = vmatmul.mubr.bf16.gmra.mrb[0].mxu0 %v506
    %v542 = vpop.f32.mrb[0].mxu0
    %v543 = vadd.f32 %v345, %v542
    %v544 = vpop.f32.mrb[0].mxu0
    %v545 = vpop.f32.mrb[0].mxu0
    %v546 = vpop.f32.mrb[0].mxu0
    %547 = vdwg.mxu0
    %v548 = vmul.f32 %v543, %v54
    %v549 = vxor.u32 %v548, 2147483648
    %v550 = vmul.f32 %v549, 1.442695
    %v551 = vpow.pop %v550
    %v552 = vadd.f32 %v551, 1.0
    %v553 = vrcp.pop %v552
    %v554 = vmul.f32 1.0, %v553
    %v555 = vmul.f32 %v554, %v54
    %v556 = vadd.f32 %v555, %v55
    %v557 = vmul.f32 %v556, %v410
    %559 = vrot.lane.b32.xlu0 %v556, 64
    %v560 = vpop.permute.xlu0 %559
    %v562 = vmul.f32 %v556, %v560
    %564 = vrot.lane.b32.xlu0 %v562, 32
    %v565 = vpop.permute.xlu0 %564
    %v567 = vadd.f32 %v557, %v565
    %v568 = vtanh.pop %v567
    %570 = vrot.lane.b32.xlu0 %v568, 64
    %v571 = vpop.permute.xlu0 %570
    %v573 = vmul.f32 %v556, %v571
    %s574 = scalar_lea.vmem [#allocation2], 3
    %v575 = vld [vmem:[%s574] ss:$8 sm:$0xf]
    %v576 = vld [vmem:[%s574] ss:$8 sm:$0xf0]
    %v577 = vor.u32 %v575, %v576
    %v578 = vpack.c.bf16 %v494, %v494
    %580 = vrot.lane.b32.xlu0 %v578, 32
    %v581 = vpop.permute.xlu0 %580
    %v583 = vsel %vm186, %v581, 0
    %585 = vmatprep.subr.bf16.mxu0 0
    %586 = vmatpush1.bf16.msra.mxu0 %v60
    %587 = vmatprep.subr.bf16.mxu0 0
    %588 = vmatpush1.bf16.msra.mxu0 %v61
    %589 = vmatprep.subr.bf16.mxu0 0
    %590 = vmatpush1.bf16.msra.mxu0 0
    %591 = vmatprep.subr.bf16.mxu0 0
    %592 = vmatpush1.bf16.msra.mxu0 0
    %593 = vmatprep.subr.bf16.mxu0 0
    %594 = vmatpush1.bf16.msra.mxu0 0
    %595 = vmatprep.subr.bf16.mxu0 0
    %596 = vmatpush1.bf16.msra.mxu0 0
    %597 = vmatprep.subr.bf16.mxu0 0
    %598 = vmatpush1.bf16.msra.mxu0 0
    %599 = vmatprep.subr.bf16.mxu0 0
    %600 = vmatpush1.bf16.msra.mxu0 0
    %601 = vmatprep.subr.bf16.mxu0 0
    %602 = vmatpush1.bf16.msra.mxu0 0
    %603 = vmatprep.subr.bf16.mxu0 0
    %604 = vmatpush1.bf16.msra.mxu0 0
    %605 = vmatprep.subr.bf16.mxu0 0
    %606 = vmatpush1.bf16.msra.mxu0 0
    %607 = vmatprep.subr.bf16.mxu0 0
    %608 = vmatpush1.bf16.msra.mxu0 0
    %609 = vmatprep.subr.bf16.mxu0 0
    %610 = vmatpush1.bf16.msra.mxu0 0
    %611 = vmatprep.subr.bf16.mxu0 0
    %612 = vmatpush1.bf16.msra.mxu0 0
    %613 = vmatprep.subr.bf16.mxu0 0
    %614 = vmatpush1.bf16.msra.mxu0 0
    %615 = vmatprep.subr.bf16.mxu0 0
    %616 = vmatpush1.bf16.msra.mxu0 0
    %617 = vmatprep.mubr.bf16.mxu0 0
    %618 = vmatmul.mubr.bf16.gmra.mrb[0].mxu0 %v583
    %v619 = vpop.f32.mrb[0].mxu0
    %v620 = vadd.f32 0.0, %v619
    %v621 = vpop.f32.mrb[0].mxu0
    %v622 = vpop.f32.mrb[0].mxu0
    %v623 = vpop.f32.mrb[0].mxu0
    %624 = vdwg.mxu0
    %v625 = vadd.f32 %v577, %v620
    %v626 = vmul.f32 %v625, %v54
    %v627 = vxor.u32 %v626, 2147483648
    %v628 = vmul.f32 %v627, 1.442695
    %v629 = vpow.pop %v628
    %v630 = vadd.f32 %v629, 1.0
    %v631 = vrcp.pop %v630
    %v632 = vmul.f32 1.0, %v631
    %v633 = vmul.f32 %v632, %v54
    %v634 = vadd.f32 %v633, %v55
    %v635 = vmul.f32 %v634, %v488
    %637 = vrot.lane.b32.xlu0 %v634, 64
    %v638 = vpop.permute.xlu0 %637
    %v640 = vmul.f32 %v634, %v638
    %642 = vrot.lane.b32.xlu0 %v640, 32
    %v643 = vpop.permute.xlu0 %642
    %v645 = vadd.f32 %v635, %v643
    %v646 = vtanh.pop %v645
    %648 = vrot.lane.b32.xlu0 %v646, 64
    %v649 = vpop.permute.xlu0 %648
    %v651 = vmul.f32 %v634, %v649
    %653 = vrot.lane.b32.xlu0 %v494, 32
    %v654 = vpop.permute.xlu0 %653
    %657 = vrot.lane.b32.xlu0 %v573, 64
    %v658 = vpop.permute.xlu0 %657
    %v660 = vsel %vm186, %v654, %v658
    %v661 = vpack.c.bf16 %v660, %v660
    %v663 = vsel %vm347, %v661, 0
    %665 = vmatprep.subr.bf16.mxu0 0
    %666 = vmatpush1.bf16.msra.mxu0 %v71
    %667 = vmatprep.subr.bf16.mxu0 0
    %668 = vmatpush1.bf16.msra.mxu0 %v72
    %669 = vmatprep.subr.bf16.mxu0 0
    %670 = vmatpush1.bf16.msra.mxu0 %v73
    %671 = vmatprep.subr.bf16.mxu0 0
    %672 = vmatpush1.bf16.msra.mxu0 %v74
    %673 = vmatprep.subr.bf16.mxu0 0
    %674 = vmatpush1.bf16.msra.mxu0 0
    %675 = vmatprep.subr.bf16.mxu0 0
    %676 = vmatpush1.bf16.msra.mxu0 0
    %677 = vmatprep.subr.bf16.mxu0 0
    %678 = vmatpush1.bf16.msra.mxu0 0
    %679 = vmatprep.subr.bf16.mxu0 0
    %680 = vmatpush1.bf16.msra.mxu0 0
    %681 = vmatprep.subr.bf16.mxu0 0
    %682 = vmatpush1.bf16.msra.mxu0 0
    %683 = vmatprep.subr.bf16.mxu0 0
    %684 = vmatpush1.bf16.msra.mxu0 0
    %685 = vmatprep.subr.bf16.mxu0 0
    %686 = vmatpush1.bf16.msra.mxu0 0
    %687 = vmatprep.subr.bf16.mxu0 0
    %688 = vmatpush1.bf16.msra.mxu0 0
    %689 = vmatprep.subr.bf16.mxu0 0
    %690 = vmatpush1.bf16.msra.mxu0 0
    %691 = vmatprep.subr.bf16.mxu0 0
    %692 = vmatpush1.bf16.msra.mxu0 0
    %693 = vmatprep.subr.bf16.mxu0 0
    %694 = vmatpush1.bf16.msra.mxu0 0
    %695 = vmatprep.subr.bf16.mxu0 0
    %696 = vmatpush1.bf16.msra.mxu0 0
    %697 = vmatprep.mubr.bf16.mxu0 0
    %698 = vmatmul.mubr.bf16.gmra.mrb[0].mxu0 %v663
    %v699 = vpop.f32.mrb[0].mxu0
    %v700 = vadd.f32 %v345, %v699
    %v701 = vpop.f32.mrb[0].mxu0
    %v702 = vpop.f32.mrb[0].mxu0
    %v703 = vpop.f32.mrb[0].mxu0
    %704 = vdwg.mxu0
    %v705 = vmul.f32 %v700, %v54
    %v706 = vxor.u32 %v705, 2147483648
    %v707 = vmul.f32 %v706, 1.442695
    %v708 = vpow.pop %v707
    %v709 = vadd.f32 %v708, 1.0
    %v710 = vrcp.pop %v709
    %v711 = vmul.f32 1.0, %v710
    %v712 = vmul.f32 %v711, %v54
    %v713 = vadd.f32 %v712, %v55
    %v714 = vmul.f32 %v713, %v567
    %716 = vrot.lane.b32.xlu0 %v713, 64
    %v717 = vpop.permute.xlu0 %716
    %v719 = vmul.f32 %v713, %v717
    %721 = vrot.lane.b32.xlu0 %v719, 32
    %v722 = vpop.permute.xlu0 %721
    %v724 = vadd.f32 %v714, %v722
    %v725 = vtanh.pop %v724
    %727 = vrot.lane.b32.xlu0 %v725, 64
    %v728 = vpop.permute.xlu0 %727
    %v730 = vmul.f32 %v713, %v728
    %s731 = scalar_lea.vmem [#allocation2], 4
    %v732 = vld [vmem:[%s731] ss:$8 sm:$0xf]
    %v733 = vld [vmem:[%s731] ss:$8 sm:$0xf0]
    %v734 = vor.u32 %v732, %v733
    %v735 = vpack.c.bf16 %v651, %v651
    %737 = vrot.lane.b32.xlu0 %v735, 32
    %v738 = vpop.permute.xlu0 %737
    %v740 = vsel %vm186, %v738, 0
    %742 = vmatprep.subr.bf16.mxu0 0
    %743 = vmatpush1.bf16.msra.mxu0 %v60
    %744 = vmatprep.subr.bf16.mxu0 0
    %745 = vmatpush1.bf16.msra.mxu0 %v61
    %746 = vmatprep.subr.bf16.mxu0 0
    %747 = vmatpush1.bf16.msra.mxu0 0
    %748 = vmatprep.subr.bf16.mxu0 0
    %749 = vmatpush1.bf16.msra.mxu0 0
    %750 = vmatprep.subr.bf16.mxu0 0
    %751 = vmatpush1.bf16.msra.mxu0 0
    %752 = vmatprep.subr.bf16.mxu0 0
    %753 = vmatpush1.bf16.msra.mxu0 0
    %754 = vmatprep.subr.bf16.mxu0 0
    %755 = vmatpush1.bf16.msra.mxu0 0
    %756 = vmatprep.subr.bf16.mxu0 0
    %757 = vmatpush1.bf16.msra.mxu0 0
    %758 = vmatprep.subr.bf16.mxu0 0
    %759 = vmatpush1.bf16.msra.mxu0 0
    %760 = vmatprep.subr.bf16.mxu0 0
    %761 = vmatpush1.bf16.msra.mxu0 0
    %762 = vmatprep.subr.bf16.mxu0 0
    %763 = vmatpush1.bf16.msra.mxu0 0
    %764 = vmatprep.subr.bf16.mxu0 0
    %765 = vmatpush1.bf16.msra.mxu0 0
    %766 = vmatprep.subr.bf16.mxu0 0
    %767 = vmatpush1.bf16.msra.mxu0 0
    %768 = vmatprep.subr.bf16.mxu0 0
    %769 = vmatpush1.bf16.msra.mxu0 0
    %770 = vmatprep.subr.bf16.mxu0 0
    %771 = vmatpush1.bf16.msra.mxu0 0
    %772 = vmatprep.subr.bf16.mxu0 0
    %773 = vmatpush1.bf16.msra.mxu0 0
    %774 = vmatprep.mubr.bf16.mxu0 0
    %775 = vmatmul.mubr.bf16.gmra.mrb[0].mxu0 %v740
    %v776 = vpop.f32.mrb[0].mxu0
    %v777 = vadd.f32 0.0, %v776
    %v778 = vpop.f32.mrb[0].mxu0
    %v779 = vpop.f32.mrb[0].mxu0
    %v780 = vpop.f32.mrb[0].mxu0
    %781 = vdwg.mxu0
    %v782 = vadd.f32 %v734, %v777
    %v783 = vmul.f32 %v782, %v54
    %v784 = vxor.u32 %v783, 2147483648
    %v785 = vmul.f32 %v784, 1.442695
    %v786 = vpow.pop %v785
    %v787 = vadd.f32 %v786, 1.0
    %v788 = vrcp.pop %v787
    %v789 = vmul.f32 1.0, %v788
    %v790 = vmul.f32 %v789, %v54
    %v791 = vadd.f32 %v790, %v55
    %v792 = vmul.f32 %v791, %v645
    %794 = vrot.lane.b32.xlu0 %v791, 64
    %v795 = vpop.permute.xlu0 %794
    %v797 = vmul.f32 %v791, %v795
    %799 = vrot.lane.b32.xlu0 %v797, 32
    %v800 = vpop.permute.xlu0 %799
    %v802 = vadd.f32 %v792, %v800
    %v803 = vtanh.pop %v802
    %805 = vrot.lane.b32.xlu0 %v803, 64
    %v806 = vpop.permute.xlu0 %805
    %v808 = vmul.f32 %v791, %v806
    %810 = vrot.lane.b32.xlu0 %v651, 32
    %v811 = vpop.permute.xlu0 %810
    %814 = vrot.lane.b32.xlu0 %v730, 64
    %v815 = vpop.permute.xlu0 %814
    %v817 = vsel %vm186, %v811, %v815
    %v818 = vpack.c.bf16 %v817, %v817
    %v820 = vsel %vm347, %v818, 0
    %822 = vmatprep.subr.bf16.mxu0 0
    %823 = vmatpush1.bf16.msra.mxu0 %v71
    %824 = vmatprep.subr.bf16.mxu0 0
    %825 = vmatpush1.bf16.msra.mxu0 %v72
    %826 = vmatprep.subr.bf16.mxu0 0
    %827 = vmatpush1.bf16.msra.mxu0 %v73
    %828 = vmatprep.subr.bf16.mxu0 0
    %829 = vmatpush1.bf16.msra.mxu0 %v74
    %830 = vmatprep.subr.bf16.mxu0 0
    %831 = vmatpush1.bf16.msra.mxu0 0
    %832 = vmatprep.subr.bf16.mxu0 0
    %833 = vmatpush1.bf16.msra.mxu0 0
    %834 = vmatprep.subr.bf16.mxu0 0
    %835 = vmatpush1.bf16.msra.mxu0 0
    %836 = vmatprep.subr.bf16.mxu0 0
    %837 = vmatpush1.bf16.msra.mxu0 0
    %838 = vmatprep.subr.bf16.mxu0 0
    %839 = vmatpush1.bf16.msra.mxu0 0
    %840 = vmatprep.subr.bf16.mxu0 0
    %841 = vmatpush1.bf16.msra.mxu0 0
    %842 = vmatprep.subr.bf16.mxu0 0
    %843 = vmatpush1.bf16.msra.mxu0 0
    %844 = vmatprep.subr.bf16.mxu0 0
    %845 = vmatpush1.bf16.msra.mxu0 0
    %846 = vmatprep.subr.bf16.mxu0 0
    %847 = vmatpush1.bf16.msra.mxu0 0
    %848 = vmatprep.subr.bf16.mxu0 0
    %849 = vmatpush1.bf16.msra.mxu0 0
    %850 = vmatprep.subr.bf16.mxu0 0
    %851 = vmatpush1.bf16.msra.mxu0 0
    %852 = vmatprep.subr.bf16.mxu0 0
    %853 = vmatpush1.bf16.msra.mxu0 0
    %854 = vmatprep.mubr.bf16.mxu0 0
    %855 = vmatmul.mubr.bf16.gmra.mrb[0].mxu0 %v820
    %v856 = vpop.f32.mrb[0].mxu0
    %v857 = vadd.f32 %v345, %v856
    %v858 = vpop.f32.mrb[0].mxu0
    %v859 = vpop.f32.mrb[0].mxu0
    %v860 = vpop.f32.mrb[0].mxu0
    %861 = vdwg.mxu0
    %v862 = vmul.f32 %v857, %v54
    %v863 = vxor.u32 %v862, 2147483648
    %v864 = vmul.f32 %v863, 1.442695
    %v865 = vpow.pop %v864
    %v866 = vadd.f32 %v865, 1.0
    %v867 = vrcp.pop %v866
    %v868 = vmul.f32 1.0, %v867
    %v869 = vmul.f32 %v868, %v54
    %v870 = vadd.f32 %v869, %v55
    %v871 = vmul.f32 %v870, %v724
    %873 = vrot.lane.b32.xlu0 %v870, 64
    %v874 = vpop.permute.xlu0 %873
    %v876 = vmul.f32 %v870, %v874
    %878 = vrot.lane.b32.xlu0 %v876, 32
    %v879 = vpop.permute.xlu0 %878
    %v881 = vadd.f32 %v871, %v879
    %v882 = vtanh.pop %v881
    %884 = vrot.lane.b32.xlu0 %v882, 64
    %v885 = vpop.permute.xlu0 %884
    %v887 = vmul.f32 %v870, %v885
    %s888 = scalar_lea.vmem [#allocation2], 5
    %v889 = vld [vmem:[%s888] ss:$8 sm:$0xf]
    %v890 = vld [vmem:[%s888] ss:$8 sm:$0xf0]
    %v891 = vor.u32 %v889, %v890
    %v892 = vpack.c.bf16 %v808, %v808
    %894 = vrot.lane.b32.xlu0 %v892, 32
    %v895 = vpop.permute.xlu0 %894
    %v897 = vsel %vm186, %v895, 0
    %899 = vmatprep.subr.bf16.mxu0 0
    %900 = vmatpush1.bf16.msra.mxu0 %v60
    %901 = vmatprep.subr.bf16.mxu0 0
    %902 = vmatpush1.bf16.msra.mxu0 %v61
    %903 = vmatprep.subr.bf16.mxu0 0
    %904 = vmatpush1.bf16.msra.mxu0 0
    %905 = vmatprep.subr.bf16.mxu0 0
    %906 = vmatpush1.bf16.msra.mxu0 0
    %907 = vmatprep.subr.bf16.mxu0 0
    %908 = vmatpush1.bf16.msra.mxu0 0
    %909 = vmatprep.subr.bf16.mxu0 0
    %910 = vmatpush1.bf16.msra.mxu0 0
    %911 = vmatprep.subr.bf16.mxu0 0
    %912 = vmatpush1.bf16.msra.mxu0 0
    %913 = vmatprep.subr.bf16.mxu0 0
    %914 = vmatpush1.bf16.msra.mxu0 0
    %915 = vmatprep.subr.bf16.mxu0 0
    %916 = vmatpush1.bf16.msra.mxu0 0
    %917 = vmatprep.subr.bf16.mxu0 0
    %918 = vmatpush1.bf16.msra.mxu0 0
    %919 = vmatprep.subr.bf16.mxu0 0
    %920 = vmatpush1.bf16.msra.mxu0 0
    %921 = vmatprep.subr.bf16.mxu0 0
    %922 = vmatpush1.bf16.msra.mxu0 0
    %923 = vmatprep.subr.bf16.mxu0 0
    %924 = vmatpush1.bf16.msra.mxu0 0
    %925 = vmatprep.subr.bf16.mxu0 0
    %926 = vmatpush1.bf16.msra.mxu0 0
    %927 = vmatprep.subr.bf16.mxu0 0
    %928 = vmatpush1.bf16.msra.mxu0 0
    %929 = vmatprep.subr.bf16.mxu0 0
    %930 = vmatpush1.bf16.msra.mxu0 0
    %931 = vmatprep.mubr.bf16.mxu0 0
    %932 = vmatmul.mubr.bf16.gmra.mrb[0].mxu0 %v897
    %v933 = vpop.f32.mrb[0].mxu0
    %v934 = vadd.f32 0.0, %v933
    %v935 = vpop.f32.mrb[0].mxu0
    %v936 = vpop.f32.mrb[0].mxu0
    %v937 = vpop.f32.mrb[0].mxu0
    %938 = vdwg.mxu0
    %v939 = vadd.f32 %v891, %v934
    %v940 = vmul.f32 %v939, %v54
    %v941 = vxor.u32 %v940, 2147483648
    %v942 = vmul.f32 %v941, 1.442695
    %v943 = vpow.pop %v942
    %v944 = vadd.f32 %v943, 1.0
    %v945 = vrcp.pop %v944
    %v946 = vmul.f32 1.0, %v945
    %v947 = vmul.f32 %v946, %v54
    %v948 = vadd.f32 %v947, %v55
    %v949 = vmul.f32 %v948, %v802
    %951 = vrot.lane.b32.xlu0 %v948, 64
    %v952 = vpop.permute.xlu0 %951
    %v954 = vmul.f32 %v948, %v952
    %956 = vrot.lane.b32.xlu0 %v954, 32
    %v957 = vpop.permute.xlu0 %956
    %v959 = vadd.f32 %v949, %v957
    %v960 = vtanh.pop %v959
    %962 = vrot.lane.b32.xlu0 %v960, 64
    %v963 = vpop.permute.xlu0 %962
    %v965 = vmul.f32 %v948, %v963
    %967 = vrot.lane.b32.xlu0 %v808, 32
    %v968 = vpop.permute.xlu0 %967
    %971 = vrot.lane.b32.xlu0 %v887, 64
    %v972 = vpop.permute.xlu0 %971
    %v974 = vsel %vm186, %v968, %v972
    %v975 = vpack.c.bf16 %v974, %v974
    %v977 = vsel %vm347, %v975, 0
    %979 = vmatprep.subr.bf16.mxu0 0
    %980 = vmatpush1.bf16.msra.mxu0 %v71
    %981 = vmatprep.subr.bf16.mxu0 0
    %982 = vmatpush1.bf16.msra.mxu0 %v72
    %983 = vmatprep.subr.bf16.mxu0 0
    %984 = vmatpush1.bf16.msra.mxu0 %v73
    %985 = vmatprep.subr.bf16.mxu0 0
    %986 = vmatpush1.bf16.msra.mxu0 %v74
    %987 = vmatprep.subr.bf16.mxu0 0
    %988 = vmatpush1.bf16.msra.mxu0 0
    %989 = vmatprep.subr.bf16.mxu0 0
    %990 = vmatpush1.bf16.msra.mxu0 0
    %991 = vmatprep.subr.bf16.mxu0 0
    %992 = vmatpush1.bf16.msra.mxu0 0
    %993 = vmatprep.subr.bf16.mxu0 0
    %994 = vmatpush1.bf16.msra.mxu0 0
    %995 = vmatprep.subr.bf16.mxu0 0
    %996 = vmatpush1.bf16.msra.mxu0 0
    %997 = vmatprep.subr.bf16.mxu0 0
    %998 = vmatpush1.bf16.msra.mxu0 0
    %999 = vmatprep.subr.bf16.mxu0 0
    %1000 = vmatpush1.bf16.msra.mxu0 0
    %1001 = vmatprep.subr.bf16.mxu0 0
    %1002 = vmatpush1.bf16.msra.mxu0 0
    %1003 = vmatprep.subr.bf16.mxu0 0
    %1004 = vmatpush1.bf16.msra.mxu0 0
    %1005 = vmatprep.subr.bf16.mxu0 0
    %1006 = vmatpush1.bf16.msra.mxu0 0
    %1007 = vmatprep.subr.bf16.mxu0 0
    %1008 = vmatpush1.bf16.msra.mxu0 0
    %1009 = vmatprep.subr.bf16.mxu0 0
    %1010 = vmatpush1.bf16.msra.mxu0 0
    %1011 = vmatprep.mubr.bf16.mxu0 0
    %1012 = vmatmul.mubr.bf16.gmra.mrb[0].mxu0 %v977
    %v1013 = vpop.f32.mrb[0].mxu0
    %v1014 = vadd.f32 %v345, %v1013
    %v1015 = vpop.f32.mrb[0].mxu0
    %v1016 = vpop.f32.mrb[0].mxu0
    %v1017 = vpop.f32.mrb[0].mxu0
    %1018 = vdwg.mxu0
    %v1019 = vmul.f32 %v1014, %v54
    %v1020 = vxor.u32 %v1019, 2147483648
    %v1021 = vmul.f32 %v1020, 1.442695
    %v1022 = vpow.pop %v1021
    %v1023 = vadd.f32 %v1022, 1.0
    %v1024 = vrcp.pop %v1023
    %v1025 = vmul.f32 1.0, %v1024
    %v1026 = vmul.f32 %v1025, %v54
    %v1027 = vadd.f32 %v1026, %v55
    %v1028 = vmul.f32 %v1027, %v881
    %1030 = vrot.lane.b32.xlu0 %v1027, 64
    %v1031 = vpop.permute.xlu0 %1030
    %v1033 = vmul.f32 %v1027, %v1031
    %1035 = vrot.lane.b32.xlu0 %v1033, 32
    %v1036 = vpop.permute.xlu0 %1035
    %v1038 = vadd.f32 %v1028, %v1036
    %v1039 = vtanh.pop %v1038
    %1041 = vrot.lane.b32.xlu0 %v1039, 64
    %v1042 = vpop.permute.xlu0 %1041
    %v1044 = vmul.f32 %v1027, %v1042
    %s1045 = scalar_lea.vmem [#allocation2], 6
    %v1046 = vld [vmem:[%s1045] ss:$8 sm:$0xf]
    %v1047 = vld [vmem:[%s1045] ss:$8 sm:$0xf0]
    %v1048 = vor.u32 %v1046, %v1047
    %v1049 = vpack.c.bf16 %v965, %v965
    %1051 = vrot.lane.b32.xlu0 %v1049, 32
    %v1052 = vpop.permute.xlu0 %1051
    %v1054 = vsel %vm186, %v1052, 0
    %1056 = vmatprep.subr.bf16.mxu0 0
    %1057 = vmatpush1.bf16.msra.mxu0 %v60
    %1058 = vmatprep.subr.bf16.mxu0 0
    %1059 = vmatpush1.bf16.msra.mxu0 %v61
    %1060 = vmatprep.subr.bf16.mxu0 0
    %1061 = vmatpush1.bf16.msra.mxu0 0
    %1062 = vmatprep.subr.bf16.mxu0 0
    %1063 = vmatpush1.bf16.msra.mxu0 0
    %1064 = vmatprep.subr.bf16.mxu0 0
    %1065 = vmatpush1.bf16.msra.mxu0 0
    %1066 = vmatprep.subr.bf16.mxu0 0
    %1067 = vmatpush1.bf16.msra.mxu0 0
    %1068 = vmatprep.subr.bf16.mxu0 0
    %1069 = vmatpush1.bf16.msra.mxu0 0
    %1070 = vmatprep.subr.bf16.mxu0 0
    %1071 = vmatpush1.bf16.msra.mxu0 0
    %1072 = vmatprep.subr.bf16.mxu0 0
    %1073 = vmatpush1.bf16.msra.mxu0 0
    %1074 = vmatprep.subr.bf16.mxu0 0
    %1075 = vmatpush1.bf16.msra.mxu0 0
    %1076 = vmatprep.subr.bf16.mxu0 0
    %1077 = vmatpush1.bf16.msra.mxu0 0
    %1078 = vmatprep.subr.bf16.mxu0 0
    %1079 = vmatpush1.bf16.msra.mxu0 0
    %1080 = vmatprep.subr.bf16.mxu0 0
    %1081 = vmatpush1.bf16.msra.mxu0 0
    %1082 = vmatprep.subr.bf16.mxu0 0
    %1083 = vmatpush1.bf16.msra.mxu0 0
    %1084 = vmatprep.subr.bf16.mxu0 0
    %1085 = vmatpush1.bf16.msra.mxu0 0
    %1086 = vmatprep.subr.bf16.mxu0 0
    %1087 = vmatpush1.bf16.msra.mxu0 0
    %1088 = vmatprep.mubr.bf16.mxu0 0
    %1089 = vmatmul.mubr.bf16.gmra.mrb[0].mxu0 %v1054
    %v1090 = vpop.f32.mrb[0].mxu0
    %v1091 = vadd.f32 0.0, %v1090
    %v1092 = vpop.f32.mrb[0].mxu0
    %v1093 = vpop.f32.mrb[0].mxu0
    %v1094 = vpop.f32.mrb[0].mxu0
    %1095 = vdwg.mxu0
    %v1096 = vadd.f32 %v1048, %v1091
    %v1097 = vmul.f32 %v1096, %v54
    %v1098 = vxor.u32 %v1097, 2147483648
    %v1099 = vmul.f32 %v1098, 1.442695
    %v1100 = vpow.pop %v1099
    %v1101 = vadd.f32 %v1100, 1.0
    %v1102 = vrcp.pop %v1101
    %v1103 = vmul.f32 1.0, %v1102
    %v1104 = vmul.f32 %v1103, %v54
    %v1105 = vadd.f32 %v1104, %v55
    %v1106 = vmul.f32 %v1105, %v959
    %1108 = vrot.lane.b32.xlu0 %v1105, 64
    %v1109 = vpop.permute.xlu0 %1108
    %v1111 = vmul.f32 %v1105, %v1109
    %1113 = vrot.lane.b32.xlu0 %v1111, 32
    %v1114 = vpop.permute.xlu0 %1113
    %v1116 = vadd.f32 %v1106, %v1114
    %v1117 = vtanh.pop %v1116
    %1119 = vrot.lane.b32.xlu0 %v1117, 64
    %v1120 = vpop.permute.xlu0 %1119
    %v1122 = vmul.f32 %v1105, %v1120
    %1124 = vrot.lane.b32.xlu0 %v965, 32
    %v1125 = vpop.permute.xlu0 %1124
    %1128 = vrot.lane.b32.xlu0 %v1044, 64
    %v1129 = vpop.permute.xlu0 %1128
    %v1131 = vsel %vm186, %v1125, %v1129
    %v1132 = vpack.c.bf16 %v1131, %v1131
    %v1134 = vsel %vm347, %v1132, 0
    %1136 = vmatprep.subr.bf16.mxu0 0
    %1137 = vmatpush1.bf16.msra.mxu0 %v71
    %1138 = vmatprep.subr.bf16.mxu0 0
    %1139 = vmatpush1.bf16.msra.mxu0 %v72
    %1140 = vmatprep.subr.bf16.mxu0 0
    %1141 = vmatpush1.bf16.msra.mxu0 %v73
    %1142 = vmatprep.subr.bf16.mxu0 0
    %1143 = vmatpush1.bf16.msra.mxu0 %v74
    %1144 = vmatprep.subr.bf16.mxu0 0
    %1145 = vmatpush1.bf16.msra.mxu0 0
    %1146 = vmatprep.subr.bf16.mxu0 0
    %1147 = vmatpush1.bf16.msra.mxu0 0
    %1148 = vmatprep.subr.bf16.mxu0 0
    %1149 = vmatpush1.bf16.msra.mxu0 0
    %1150 = vmatprep.subr.bf16.mxu0 0
    %1151 = vmatpush1.bf16.msra.mxu0 0
    %1152 = vmatprep.subr.bf16.mxu0 0
    %1153 = vmatpush1.bf16.msra.mxu0 0
    %1154 = vmatprep.subr.bf16.mxu0 0
    %1155 = vmatpush1.bf16.msra.mxu0 0
    %1156 = vmatprep.subr.bf16.mxu0 0
    %1157 = vmatpush1.bf16.msra.mxu0 0
    %1158 = vmatprep.subr.bf16.mxu0 0
    %1159 = vmatpush1.bf16.msra.mxu0 0
    %1160 = vmatprep.subr.bf16.mxu0 0
    %1161 = vmatpush1.bf16.msra.mxu0 0
    %1162 = vmatprep.subr.bf16.mxu0 0
    %1163 = vmatpush1.bf16.msra.mxu0 0
    %1164 = vmatprep.subr.bf16.mxu0 0
    %1165 = vmatpush1.bf16.msra.mxu0 0
    %1166 = vmatprep.subr.bf16.mxu0 0
    %1167 = vmatpush1.bf16.msra.mxu0 0
    %1168 = vmatprep.mubr.bf16.mxu0 0
    %1169 = vmatmul.mubr.bf16.gmra.mrb[0].mxu0 %v1134
    %v1170 = vpop.f32.mrb[0].mxu0
    %v1171 = vadd.f32 %v345, %v1170
    %v1172 = vpop.f32.mrb[0].mxu0
    %v1173 = vpop.f32.mrb[0].mxu0
    %v1174 = vpop.f32.mrb[0].mxu0
    %1175 = vdwg.mxu0
    %v1176 = vmul.f32 %v1171, %v54
    %v1177 = vxor.u32 %v1176, 2147483648
    %v1178 = vmul.f32 %v1177, 1.442695
    %v1179 = vpow.pop %v1178
    %v1180 = vadd.f32 %v1179, 1.0
    %v1181 = vrcp.pop %v1180
    %v1182 = vmul.f32 1.0, %v1181
    %v1183 = vmul.f32 %v1182, %v54
    %v1184 = vadd.f32 %v1183, %v55
    %v1185 = vmul.f32 %v1184, %v1038
    %1187 = vrot.lane.b32.xlu0 %v1184, 64
    %v1188 = vpop.permute.xlu0 %1187
    %v1190 = vmul.f32 %v1184, %v1188
    %1192 = vrot.lane.b32.xlu0 %v1190, 32
    %v1193 = vpop.permute.xlu0 %1192
    %v1195 = vadd.f32 %v1185, %v1193
    %v1196 = vtanh.pop %v1195
    %1198 = vrot.lane.b32.xlu0 %v1196, 64
    %v1199 = vpop.permute.xlu0 %1198
    %v1201 = vmul.f32 %v1184, %v1199
    %s1202 = scalar_lea.vmem [#allocation2], 7
    %v1203 = vld [vmem:[%s1202] ss:$8 sm:$0xf]
    %v1204 = vld [vmem:[%s1202] ss:$8 sm:$0xf0]
    %v1205 = vor.u32 %v1203, %v1204
    %v1206 = vpack.c.bf16 %v1122, %v1122
    %1208 = vrot.lane.b32.xlu0 %v1206, 32
    %v1209 = vpop.permute.xlu0 %1208
    %v1211 = vsel %vm186, %v1209, 0
    %1213 = vmatprep.subr.bf16.mxu0 0
    %1214 = vmatpush1.bf16.msra.mxu0 %v60
    %1215 = vmatprep.subr.bf16.mxu0 0
    %1216 = vmatpush1.bf16.msra.mxu0 %v61
    %1217 = vmatprep.subr.bf16.mxu0 0
    %1218 = vmatpush1.bf16.msra.mxu0 0
    %1219 = vmatprep.subr.bf16.mxu0 0
    %1220 = vmatpush1.bf16.msra.mxu0 0
    %1221 = vmatprep.subr.bf16.mxu0 0
    %1222 = vmatpush1.bf16.msra.mxu0 0
    %1223 = vmatprep.subr.bf16.mxu0 0
    %1224 = vmatpush1.bf16.msra.mxu0 0
    %1225 = vmatprep.subr.bf16.mxu0 0
    %1226 = vmatpush1.bf16.msra.mxu0 0
    %1227 = vmatprep.subr.bf16.mxu0 0
    %1228 = vmatpush1.bf16.msra.mxu0 0
    %1229 = vmatprep.subr.bf16.mxu0 0
    %1230 = vmatpush1.bf16.msra.mxu0 0
    %1231 = vmatprep.subr.bf16.mxu0 0
    %1232 = vmatpush1.bf16.msra.mxu0 0
    %1233 = vmatprep.subr.bf16.mxu0 0
    %1234 = vmatpush1.bf16.msra.mxu0 0
    %1235 = vmatprep.subr.bf16.mxu0 0
    %1236 = vmatpush1.bf16.msra.mxu0 0
    %1237 = vmatprep.subr.bf16.mxu0 0
    %1238 = vmatpush1.bf16.msra.mxu0 0
    %1239 = vmatprep.subr.bf16.mxu0 0
    %1240 = vmatpush1.bf16.msra.mxu0 0
    %1241 = vmatprep.subr.bf16.mxu0 0
    %1242 = vmatpush1.bf16.msra.mxu0 0
    %1243 = vmatprep.subr.bf16.mxu0 0
    %1244 = vmatpush1.bf16.msra.mxu0 0
    %1245 = vmatprep.mubr.bf16.mxu0 0
    %1246 = vmatmul.mubr.bf16.gmra.mrb[0].mxu0 %v1211
    %v1247 = vpop.f32.mrb[0].mxu0
    %v1248 = vadd.f32 0.0, %v1247
    %v1249 = vpop.f32.mrb[0].mxu0
    %v1250 = vpop.f32.mrb[0].mxu0
    %v1251 = vpop.f32.mrb[0].mxu0
    %1252 = vdwg.mxu0
    %v1253 = vadd.f32 %v1205, %v1248
    %v1254 = vmul.f32 %v1253, %v54
    %v1255 = vxor.u32 %v1254, 2147483648
    %v1256 = vmul.f32 %v1255, 1.442695
    %v1257 = vpow.pop %v1256
    %v1258 = vadd.f32 %v1257, 1.0
    %v1259 = vrcp.pop %v1258
    %v1260 = vmul.f32 1.0, %v1259
    %v1261 = vmul.f32 %v1260, %v54
    %v1262 = vadd.f32 %v1261, %v55
    %v1263 = vmul.f32 %v1262, %v1116
    %1265 = vrot.lane.b32.xlu0 %v1262, 64
    %v1266 = vpop.permute.xlu0 %1265
    %v1268 = vmul.f32 %v1262, %v1266
    %1270 = vrot.lane.b32.xlu0 %v1268, 32
    %v1271 = vpop.permute.xlu0 %1270
    %v1273 = vadd.f32 %v1263, %v1271
    %v1274 = vtanh.pop %v1273
    %1276 = vrot.lane.b32.xlu0 %v1274, 64
    %v1277 = vpop.permute.xlu0 %1276
    %v1279 = vmul.f32 %v1262, %v1277
    %1281 = vrot.lane.b32.xlu0 %v1122, 32
    %v1282 = vpop.permute.xlu0 %1281
    %1285 = vrot.lane.b32.xlu0 %v1201, 64
    %v1286 = vpop.permute.xlu0 %1285
    %v1288 = vsel %vm186, %v1282, %v1286
    %v1289 = vpack.c.bf16 %v1288, %v1288
    %v1291 = vsel %vm347, %v1289, 0
    %1293 = vmatprep.subr.bf16.mxu0 0
    %1294 = vmatpush1.bf16.msra.mxu0 %v71
    %1295 = vmatprep.subr.bf16.mxu0 0
    %1296 = vmatpush1.bf16.msra.mxu0 %v72
    %1297 = vmatprep.subr.bf16.mxu0 0
    %1298 = vmatpush1.bf16.msra.mxu0 %v73
    %1299 = vmatprep.subr.bf16.mxu0 0
    %1300 = vmatpush1.bf16.msra.mxu0 %v74
    %1301 = vmatprep.subr.bf16.mxu0 0
    %1302 = vmatpush1.bf16.msra.mxu0 0
    %1303 = vmatprep.subr.bf16.mxu0 0
    %1304 = vmatpush1.bf16.msra.mxu0 0
    %1305 = vmatprep.subr.bf16.mxu0 0
    %1306 = vmatpush1.bf16.msra.mxu0 0
    %1307 = vmatprep.subr.bf16.mxu0 0
    %1308 = vmatpush1.bf16.msra.mxu0 0
    %1309 = vmatprep.subr.bf16.mxu0 0
    %1310 = vmatpush1.bf16.msra.mxu0 0
    %1311 = vmatprep.subr.bf16.mxu0 0
    %1312 = vmatpush1.bf16.msra.mxu0 0
    %1313 = vmatprep.subr.bf16.mxu0 0
    %1314 = vmatpush1.bf16.msra.mxu0 0
    %1315 = vmatprep.subr.bf16.mxu0 0
    %1316 = vmatpush1.bf16.msra.mxu0 0
    %1317 = vmatprep.subr.bf16.mxu0 0
    %1318 = vmatpush1.bf16.msra.mxu0 0
    %1319 = vmatprep.subr.bf16.mxu0 0
    %1320 = vmatpush1.bf16.msra.mxu0 0
    %1321 = vmatprep.subr.bf16.mxu0 0
    %1322 = vmatpush1.bf16.msra.mxu0 0
    %1323 = vmatprep.subr.bf16.mxu0 0
    %1324 = vmatpush1.bf16.msra.mxu0 0
    %1325 = vmatprep.mubr.bf16.mxu0 0
    %1326 = vmatmul.mubr.bf16.gmra.mrb[0].mxu0 %v1291
    %v1327 = vpop.f32.mrb[0].mxu0
    %v1328 = vadd.f32 %v345, %v1327
    %v1329 = vpop.f32.mrb[0].mxu0
    %v1330 = vpop.f32.mrb[0].mxu0
    %v1331 = vpop.f32.mrb[0].mxu0
    %1332 = vdwg.mxu0
    %v1333 = vmul.f32 %v1328, %v54
    %v1334 = vxor.u32 %v1333, 2147483648
    %v1335 = vmul.f32 %v1334, 1.442695
    %v1336 = vpow.pop %v1335
    %v1337 = vadd.f32 %v1336, 1.0
    %v1338 = vrcp.pop %v1337
    %v1339 = vmul.f32 1.0, %v1338
    %v1340 = vmul.f32 %v1339, %v54
    %v1341 = vadd.f32 %v1340, %v55
    %v1342 = vmul.f32 %v1341, %v1195
    %1344 = vrot.lane.b32.xlu0 %v1341, 64
    %v1345 = vpop.permute.xlu0 %1344
    %v1347 = vmul.f32 %v1341, %v1345
    %1349 = vrot.lane.b32.xlu0 %v1347, 32
    %v1350 = vpop.permute.xlu0 %1349
    %v1352 = vadd.f32 %v1342, %v1350
    %v1353 = vtanh.pop %v1352
    %1355 = vrot.lane.b32.xlu0 %v1353, 64
    %v1356 = vpop.permute.xlu0 %1355
    %v1358 = vmul.f32 %v1341, %v1356
    %1360 = vrot.lane.b32.xlu0 %v1279, 32
    %v1361 = vpop.permute.xlu0 %1360
    %1364 = vrot.lane.b32.xlu0 %v1358, 64
    %v1365 = vpop.permute.xlu0 %1364
    %v1367 = vsel %vm186, %v1361, %v1365
    %v1368 = vpack.c.bf16 %v1367, %v1367
    %v1370 = vsel %vm347, %v1368, 0
    %1372 = vmatprep.subr.bf16.mxu0 0
    %1373 = vmatpush1.bf16.msra.mxu0 %v71
    %1374 = vmatprep.subr.bf16.mxu0 0
    %1375 = vmatpush1.bf16.msra.mxu0 %v72
    %1376 = vmatprep.subr.bf16.mxu0 0
    %1377 = vmatpush1.bf16.msra.mxu0 %v73
    %1378 = vmatprep.subr.bf16.mxu0 0
    %1379 = vmatpush1.bf16.msra.mxu0 %v74
    %1380 = vmatprep.subr.bf16.mxu0 0
    %1381 = vmatpush1.bf16.msra.mxu0 0
    %1382 = vmatprep.subr.bf16.mxu0 0
    %1383 = vmatpush1.bf16.msra.mxu0 0
    %1384 = vmatprep.subr.bf16.mxu0 0
    %1385 = vmatpush1.bf16.msra.mxu0 0
    %1386 = vmatprep.subr.bf16.mxu0 0
    %1387 = vmatpush1.bf16.msra.mxu0 0
    %1388 = vmatprep.subr.bf16.mxu0 0
    %1389 = vmatpush1.bf16.msra.mxu0 0
    %1390 = vmatprep.subr.bf16.mxu0 0
    %1391 = vmatpush1.bf16.msra.mxu0 0
    %1392 = vmatprep.subr.bf16.mxu0 0
    %1393 = vmatpush1.bf16.msra.mxu0 0
    %1394 = vmatprep.subr.bf16.mxu0 0
    %1395 = vmatpush1.bf16.msra.mxu0 0
    %1396 = vmatprep.subr.bf16.mxu0 0
    %1397 = vmatpush1.bf16.msra.mxu0 0
    %1398 = vmatprep.subr.bf16.mxu0 0
    %1399 = vmatpush1.bf16.msra.mxu0 0
    %1400 = vmatprep.subr.bf16.mxu0 0
    %1401 = vmatpush1.bf16.msra.mxu0 0
    %1402 = vmatprep.subr.bf16.mxu0 0
    %1403 = vmatpush1.bf16.msra.mxu0 0
    %1404 = vmatprep.mubr.bf16.mxu0 0
    %1405 = vmatmul.mubr.bf16.gmra.mrb[0].mxu0 %v1370
    %v1406 = vpop.f32.mrb[0].mxu0
    %v1407 = vadd.f32 %v345, %v1406
    %v1408 = vpop.f32.mrb[0].mxu0
    %v1409 = vpop.f32.mrb[0].mxu0
    %v1410 = vpop.f32.mrb[0].mxu0
    %1411 = vdwg.mxu0
    %v1412 = vmul.f32 %v1407, %v54
    %v1413 = vxor.u32 %v1412, 2147483648
    %v1414 = vmul.f32 %v1413, 1.442695
    %v1415 = vpow.pop %v1414
    %v1416 = vadd.f32 %v1415, 1.0
    %v1417 = vrcp.pop %v1416
    %v1418 = vmul.f32 1.0, %v1417
    %v1419 = vmul.f32 %v1418, %v54
    %v1420 = vadd.f32 %v1419, %v55
    %v1421 = vmul.f32 %v1420, %v1352
    %1423 = vrot.lane.b32.xlu0 %v1420, 64
    %v1424 = vpop.permute.xlu0 %1423
    %v1426 = vmul.f32 %v1420, %v1424
    %1428 = vrot.lane.b32.xlu0 %v1426, 32
    %v1429 = vpop.permute.xlu0 %1428
    %v1431 = vadd.f32 %v1421, %v1429
    %v1432 = vtanh.pop %v1431
    %1434 = vrot.lane.b32.xlu0 %v1432, 64
    %v1435 = vpop.permute.xlu0 %1434
    %v1437 = vmul.f32 %v1420, %v1435
    %v1438 = vld [vmem:[%s7] sm:$0x1]
    %v1439 = vld [vmem:[#allocation3] sm:$0x1]
    %v1441 = vlaneseq
    %v1442 = vshrl.u32 %v1441, 7
    %v1443 = vsub.s32 0, %v1442
    %v1444 = vrot.slane %v1438, %v1443
    %1445 = vrot.lane.b32.xlu0 %v1444, 96
    %v1446 = vpop.permute.xlu0 %1445
    %v1448 = vmul.f32 %v1437, %v1446
    %1450 = vrot.lane.b32.xlu0 %v1448, 32
    %v1451 = vpop.permute.xlu0 %1450
    %v1453 = vsel %vm186, %v1451, 0.0
    %1454 = vadd.xlane.f32.xlu0 %v1453
    %v1455 = vpop.xlane.xlu0 %1454
    %v1457 = vlaneseq
    %v1458 = vshrl.u32 %v1457, 7
    %v1459 = vsub.s32 0, %v1458
    %v1460 = vrot.slane %v1439, %v1459
    %v1462 = vadd.f32 %v1455, %v1460
    %v1463 = vxor.u32 %v1462, 2147483648
    %v1464 = vmul.f32 %v1463, 1.442695
    %v1465 = vpow.pop %v1464
    %v1466 = vadd.f32 %v1465, 1.0
    %v1467 = vrcp.pop %v1466
    %v1468 = vmul.f32 1.0, %v1467
    %vm1469 = vcmask 7168
    %1470 = vst.msk [vmem:[%s9] sm:$0xff] %vm1469, %v1468
    // Predicated region
    $region42: #{tpu_custom_call.1} parent=1 // pred_check
      _
    $region43: #{tpu_custom_call.1} parent=1 // pred_check_branch
      %1472 = sbr.rel (0) target = $region45
    $region44: #{tpu_custom_call.1} parent=1 // pred_region
      _
    $region45: #{tpu_custom_call.1} parent=1 // pred_fallthru
      _
    // Predicated region
    $region46: #{tpu_custom_call.1} parent=1 // pred_check
      _
    $region47: #{tpu_custom_call.1} parent=1 // pred_check_branch
      %1474 = sbr.rel (0) target = $region49
    $region48: #{tpu_custom_call.1} parent=1 // pred_region
      _
    $region49: #{tpu_custom_call.1} parent=1 // pred_fallthru
      _
    %1475 = vsyncpa [#allocation5], 1

</llo_original>
